<compile_context>
chip_gen: v5e
topology: v5e:2x2
jax: 0.10.0
libtpu: 0.0.40
codegen_flags: <defaults>
</compile_context>

<pallas_src>
import math

import jax
import jax.numpy as jnp
from jax.experimental import pallas as pl
from jax.experimental.pallas import tpu as pltpu

NEG_INF = -1e30


def _round_up(x: int, m: int) -> int:
    return ((x + m - 1) // m) * m


def _nbytes(shape, dtype) -> int:
    return math.prod(shape) * jnp.dtype(dtype).itemsize


def _vmem_budget_bytes() -> int:
    """~75% of physical VMEM per TensorCore (generation-aware, safe fallback)."""
    cap = 128 << 20
    try:
        info = pltpu.get_tpu_info()
        cap = int(getattr(info, "vmem_capacity_bytes", cap) or cap)
    except Exception:
        pass
    return (cap * 3) // 4


# --------------------------------------------------------------------------
# Kernels
# --------------------------------------------------------------------------
def _make_prologue_kernel(s_valid: int):
    """GRU step + dot attention + concat Linear. `s_valid` = real encoder len."""

    def kernel(xh_ref, enc_ref,
               w_rz_ref, b_rz_ref, w_in_ref, b_in_ref, w_hn_ref, b_hn_ref,
               w_cat_h_ref, w_cat_c_ref, b_cat_ref,
               cat_ref, hid_ref):
        f32, bf16 = jnp.float32, jnp.bfloat16
        hp = hid_ref.shape[1]

        xh = xh_ref[...]                                  # (Bp, 2Hp) f32, [x || h]
        h = xh[:, hp:]
        xh_b = xh.astype(bf16)

        # ---- GRU cell (gate order r, z, n; PyTorch nn.GRU semantics) ----
        g_rz = (jnp.dot(xh_b, w_rz_ref[...], preferred_element_type=f32)
                + b_rz_ref[...])                          # [gi_r+gh_r | gi_z+gh_z]
        r = jax.nn.sigmoid(g_rz[:, :hp])
        z = jax.nn.sigmoid(g_rz[:, hp:])
        gi_n = (jnp.dot(xh_b[:, :hp], w_in_ref[...], preferred_element_type=f32)
                + b_in_ref[...])
        gh_n = (jnp.dot(xh_b[:, hp:], w_hn_ref[...], preferred_element_type=f32)
                + b_hn_ref[...])
        n = jnp.tanh(gi_n + r * gh_n)
        h_new = (1.0 - z) * n + z * h                     # (Bp, Hp) f32
        hid_ref[...] = h_new

        # ---- dot attention over encoder outputs (batched MXU matmuls) ----
        enc = enc_ref[...]                                # (Bp, Sp, Hp) bf16
        hq = h_new.astype(bf16)[:, None, :]               # (Bp, 1, Hp)
        energy = jnp.einsum('bqh,bsh->bqs', hq, enc,
                            preferred_element_type=f32)   # (Bp, 1, Sp)
        if enc.shape[1] != s_valid:                       # mask padded S positions
            s_idx = jax.lax.broadcasted_iota(jnp.int32, energy.shape, 2)
            energy = jnp.where(s_idx < s_valid, energy, NEG_INF)
        energy = energy - jnp.max(energy, axis=2, keepdims=True)
        p = jnp.exp(energy)
        denom = jnp.sum(p, axis=2, keepdims=True)
        inv = pl.reciprocal(denom, approx=True)           # EUP slot
        inv = inv * (2.0 - denom * inv)                   # one Newton step
        attn = (p * inv).astype(bf16)                     # (Bp, 1, Sp)
        context = jnp.einsum('bqs,bsh->bqh', attn, enc,
                             preferred_element_type=f32)[:, 0, :]   # (Bp, Hp)

        # ---- concat Linear(2H -> H) + tanh as two MXU matmuls (no concat) ----
        cat = jnp.tanh(
            jnp.dot(h_new.astype(bf16), w_cat_h_ref[...], preferred_element_type=f32)
            + jnp.dot(context.astype(bf16), w_cat_c_ref[...], preferred_element_type=f32)
            + b_cat_ref[...])
        cat_ref[...] = cat.astype(cat_ref.dtype)

    return kernel


def _vocab_kernel(cat_ref, w_out_ref, b_out_ref, logits_ref):
    """One streamed (Hp, tile_v) slice of the vocab projection per grid step."""
    logits_ref[...] = (jnp.dot(cat_ref[...], w_out_ref[...],
                               preferred_element_type=jnp.float32)
                       + b_out_ref[...])


# --------------------------------------------------------------------------
# One-time packing (hoisted out of the decode loop)
# --------------------------------------------------------------------------
def pack_weights(params, *, tile_v=2048):
    """Pad / gate-fuse / bf16-cast all weights once per model."""
    f32, bf16 = jnp.float32, jnp.bfloat16
    H = params["w_ih_t"].shape[0]
    V = params["w_out_t"].shape[1]
    Hp = _round_up(H, 128)

    # choose the vocab tile: lane-dense, <= padded vocab, fits the VMEM budget
    tile_v = _round_up(min(tile_v, _round_up(V, 128)), 128)
    budget = _vmem_budget_bytes()
    while tile_v > 128 and 2 * (Hp * tile_v * 2 + tile_v * 4 + 8 * tile_v * 4) > budget // 2:
        tile_v = max(128, _round_up(tile_v // 2, 128))
    Vp = _round_up(V, tile_v)

    w_ih_t, w_hh_t = params["w_ih_t"], params["w_hh_t"]      # (H, 3H), gates r,z,n
    b_ih, b_hh = params["b_ih"], params["b_hh"]              # (1, 3H)

    # r/z gates fused: [x || h] @ w_rz -> [gi_r+gh_r | gi_z+gh_z] (no zero quadrants)
    w_rz = jnp.zeros((2 * Hp, 2 * Hp), f32)
    w_rz = w_rz.at[:H, :H].set(w_ih_t[:, 0 * H:1 * H])
    w_rz = w_rz.at[:H, Hp:Hp + H].set(w_ih_t[:, 1 * H:2 * H])
    w_rz = w_rz.at[Hp:Hp + H, :H].set(w_hh_t[:, 0 * H:1 * H])
    w_rz = w_rz.at[Hp:Hp + H, Hp:Hp + H].set(w_hh_t[:, 1 * H:2 * H])
    b_rz = jnp.zeros((1, 2 * Hp), f32)
    b_rz = b_rz.at[:, :H].set(b_ih[:, 0 * H:1 * H] + b_hh[:, 0 * H:1 * H])
    b_rz = b_rz.at[:, Hp:Hp + H].set(b_ih[:, 1 * H:2 * H] + b_hh[:, 1 * H:2 * H])

    # n gate kept separate (needs r * gh_n)
    w_in = jnp.zeros((Hp, Hp), f32).at[:H, :H].set(w_ih_t[:, 2 * H:3 * H])
    b_in = jnp.zeros((1, Hp), f32).at[:, :H].set(b_ih[:, 2 * H:3 * H])
    w_hn = jnp.zeros((Hp, Hp), f32).at[:H, :H].set(w_hh_t[:, 2 * H:3 * H])
    b_hn = jnp.zeros((1, Hp), f32).at[:, :H].set(b_hh[:, 2 * H:3 * H])

    # concat Linear(2H -> H) split into the h_new part and the context part
    w_cat_h = jnp.zeros((Hp, Hp), f32).at[:H, :H].set(params["w_cat_t"][:H])
    w_cat_c = jnp.zeros((Hp, Hp), f32).at[:H, :H].set(params["w_cat_t"][H:2 * H])
    b_cat = jnp.zeros((1, Hp), f32).at[:, :H].set(params["b_cat"])

    # out Linear(H -> V); padded vocab columns are sliced off before the softmax
    w_out = jnp.zeros((Hp, Vp), f32).at[:H, :V].set(params["w_out_t"])
    b_out = jnp.zeros((1, Vp), f32).at[:, :V].set(params["b_out"])

    emb_p = jnp.zeros((params["embedding"].shape[0], Hp), f32).at[:, :H].set(
        params["embedding"])

    return {
        "H": H, "Hp": Hp, "V": V, "Vp": Vp, "tile_v": tile_v,
        "embedding": emb_p,
        "w_rz": w_rz.astype(bf16), "b_rz": b_rz,
        "w_in": w_in.astype(bf16), "b_in": b_in,
        "w_hn": w_hn.astype(bf16), "b_hn": b_hn,
        "w_cat_h": w_cat_h.astype(bf16), "w_cat_c": w_cat_c.astype(bf16),
        "b_cat": b_cat,
        "w_out": w_out.astype(bf16), "b_out": b_out,
    }


def pack_encoder(encoder_output, *, hidden_pad):
    """(S,B,H) -> padded (Bp,Sp,Hp) bf16; done once per sequence."""
    S, B, H = encoder_output.shape
    Bp = _round_up(B, 8)
    Sp = _round_up(S, 128)
    enc = jnp.zeros((Bp, Sp, hidden_pad), jnp.bfloat16)
    enc = enc.at[:B, :S, :H].set(
        jnp.transpose(encoder_output, (1, 0, 2)).astype(jnp.bfloat16))
    return enc, S


# --------------------------------------------------------------------------
# Per-step wrapper
# --------------------------------------------------------------------------
def luong_decoder_step(input_step, last_hidden, enc_packed, s_valid, weights):
    """
    input_step:  (1, B) int32 token ids
    last_hidden: (1, B, H) f32
    enc_packed:  (Bp, Sp, Hp) bf16 from pack_encoder
    s_valid:     real (unpadded) encoder length
    weights:     dict from pack_weights
    Returns (softmax probs (B, V), new hidden (1, B, H)).
    """
    f32, bf16 = jnp.float32, jnp.bfloat16
    B = input_step.shape[1]
    H, Hp = weights["H"], weights["Hp"]
    V, Vp, tile_v = weights["V"], weights["Vp"], weights["tile_v"]
    Bp, Sp, _ = enc_packed.shape
    assert Bp == _round_up(B, 8), "enc_packed batch padding mismatch"

    vmem_budget = _vmem_budget_bytes()

    # ---- per-step activations: embedding gather + [x || h] pre-concat + pad
    # TODO(synk): nn.Dropout on the embedding is identity at inference; a
    # training-mode dropout mask is not implemented.
    x = jnp.take(weights["embedding"], input_step[0], axis=0)       # (B, Hp)
    xh = jnp.zeros((Bp, 2 * Hp), f32)
    xh = xh.at[:B, :Hp].set(x)
    xh = xh.at[:B, Hp:Hp + H].set(last_hidden[0])

    # ---- prologue kernel: GRU + attention + concat Linear (one shot, no grid)
    pro_need = (_nbytes((Bp, 2 * Hp), f32) + _nbytes((Bp, Sp, Hp), bf16)
                + _nbytes((2 * Hp, 2 * Hp), bf16) + _nbytes((1, 2 * Hp), f32)
                + 4 * _nbytes((Hp, Hp), bf16) + 3 * _nbytes((1, Hp), f32)
                + _nbytes((Bp, Hp), bf16) + _nbytes((Bp, Hp), f32))
    pro_vmem = int(max(16 << 20, min(2 * pro_need + (8 << 20), vmem_budget)))
    pro_flops = 2 * Bp * (8 * Hp * Hp + 2 * Sp * Hp)
    pro_trans = Bp * (4 * Hp + Sp)

    cat, hid_p = pl.pallas_call(
        _make_prologue_kernel(int(s_valid)),
        out_shape=(jax.ShapeDtypeStruct((Bp, Hp), bf16),    # cat (vocab-matmul LHS)
                   jax.ShapeDtypeStruct((Bp, Hp), f32)),    # new hidden
        compiler_params=pltpu.CompilerParams(vmem_limit_bytes=pro_vmem),
        cost_estimate=pl.CostEstimate(flops=int(pro_flops),
                                      transcendentals=int(pro_trans),
                                      bytes_accessed=int(pro_need)),
    )(xh, enc_packed,
      weights["w_rz"], weights["b_rz"],
      weights["w_in"], weights["b_in"],
      weights["w_hn"], weights["b_hn"],
      weights["w_cat_h"], weights["w_cat_c"], weights["b_cat"])

    # ---- vocab projection: stream w_out tiles, fully parallel grid axis
    n_v = Vp // tile_v
    voc_need = (2 * (_nbytes((Hp, tile_v), bf16) + _nbytes((1, tile_v), f32)
                     + _nbytes((Bp, tile_v), f32))
                + 2 * _nbytes((Bp, Hp), bf16))
    voc_vmem = int(max(16 << 20, min(voc_need + (4 << 20), vmem_budget)))
    voc_bytes = (_nbytes((Hp, Vp), bf16) + _nbytes((1, Vp), f32)
                 + _nbytes((Bp, Vp), f32) + _nbytes((Bp, Hp), bf16))

    logits = pl.pallas_call(
        _vocab_kernel,
        grid=(n_v,),
        in_specs=[
            pl.BlockSpec((Bp, Hp), lambda v: (0, 0)),        # cat (grid-invariant)
            pl.BlockSpec((Hp, tile_v), lambda v: (0, v)),    # w_out tile (streamed)
            pl.BlockSpec((1, tile_v), lambda v: (0, v)),     # b_out tile (streamed)
        ],
        out_specs=pl.BlockSpec((Bp, tile_v), lambda v: (0, v)),
        out_shape=jax.ShapeDtypeStruct((Bp, Vp), f32),
        compiler_params=pltpu.CompilerParams(
            dimension_semantics=("parallel",),               # shards across TCs on v7x
            vmem_limit_bytes=voc_vmem,
        ),
        cost_estimate=pl.CostEstimate(flops=int(2 * Bp * Hp * Vp),
                                      transcendentals=0,
                                      bytes_accessed=int(voc_bytes)),
    )(cat, weights["w_out"], weights["b_out"])

    # Final softmax over the real vocab columns: a tiny fused XLA pass
    # (reads/writes B*V floats, negligible next to the w_out stream).
    probs = jax.nn.softmax(logits[:B, :V], axis=1)
    hidden_new = hid_p[:B, :H].reshape(1, B, H)
    return probs, hidden_new


# --------------------------------------------------------------------------
# Parameters + pure-JAX reference (mirrors the kernel's bf16/f32 precision path)
# --------------------------------------------------------------------------
def make_params(key, hidden_size, output_size):
    H, V = hidden_size, output_size
    ks = jax.random.split(key, 9)
    s = 1.0 / jnp.sqrt(H)

    def u(k, shape, scale):
        return jax.random.uniform(k, shape, jnp.float32, -scale, scale)

    return {
        "embedding": u(ks[0], (V, H), 1.0),
        # GRU weights pre-transposed for right-multiplication (gate order r,z,n)
        "w_ih_t": u(ks[1], (H, 3 * H), s),
        "w_hh_t": u(ks[2], (H, 3 * H), s),
        "b_ih": u(ks[3], (1, 3 * H), s),
        "b_hh": u(ks[4], (1, 3 * H), s),
        "w_cat_t": u(ks[5], (2 * H, H), 1.0 / jnp.sqrt(2 * H)),
        "b_cat": u(ks[6], (1, H), 1.0 / jnp.sqrt(2 * H)),
        "w_out_t": u(ks[7], (H, V), s),
        "b_out": u(ks[8], (1, V), s),
    }


def reference_step(input_step, last_hidden, encoder_output, params):
    """Pure-JAX reference (eval mode), same bf16 weight / f32-accum path."""
    f32, bf16 = jnp.float32, jnp.bfloat16
    H = last_hidden.shape[2]
    x = jnp.take(params["embedding"], input_step[0], axis=0)    # (B, H)
    h = last_hidden[0]                                          # (B, H)

    def bdot(a, b):
        return jnp.dot(a.astype(bf16), b.astype(bf16), preferred_element_type=f32)

    gi = bdot(x, params["w_ih_t"]) + params["b_ih"]
    gh = bdot(h, params["w_hh_t"]) + params["b_hh"]
    r = jax.nn.sigmoid(gi[:, :H] + gh[:, :H])
    z = jax.nn.sigmoid(gi[:, H:2 * H] + gh[:, H:2 * H])
    n = jnp.tanh(gi[:, 2 * H:] + r * gh[:, 2 * H:])
    h_new = (1.0 - z) * n + z * h

    enc = jnp.transpose(encoder_output, (1, 0, 2)).astype(bf16)   # (B, S, H)
    energy = jnp.einsum('bh,bsh->bs', h_new.astype(bf16), enc,
                        preferred_element_type=f32)
    attn = jax.nn.softmax(energy, axis=1)
    context = jnp.einsum('bs,bsh->bh', attn.astype(bf16), enc,
                         preferred_element_type=f32)

    cat_in = jnp.concatenate([h_new, context], axis=1)
    cat = jnp.tanh(bdot(cat_in, params["w_cat_t"]) + params["b_cat"])
    logits = bdot(cat, params["w_out_t"]) + params["b_out"]
    return jax.nn.softmax(logits, axis=1), h_new[None]


# --------------------------------------------------------------------------
# Test
# --------------------------------------------------------------------------
if __name__ == "__main__":
    B, H, S, V = 4, 32, 10, 300   # batch, hidden, encoder seq len, vocab
    key = jax.random.PRNGKey(0)
    kp, k1, k2, k3 = jax.random.split(key, 4)

    params = make_params(kp, H, V)
    input_step = jax.random.randint(k1, (1, B), 0, V, dtype=jnp.int32)
    last_hidden = jax.random.normal(k2, (1, B, H), jnp.float32)
    encoder_output = jax.random.normal(k3, (S, B, H), jnp.float32)

    # One-time packing (per model / per sequence), hoisted out of the decode loop.
    # tile_v=128 -> Vp=384, a 3-step vocab grid: exercises the streamed tiles.
    weights = pack_weights(params, tile_v=128)
    enc_packed, s_valid = pack_encoder(encoder_output, hidden_pad=weights["Hp"])

    out, hidden = luong_decoder_step(input_step, last_hidden, enc_packed,
                                     s_valid, weights)
    out = jax.block_until_ready(out)
    hidden = jax.block_until_ready(hidden)

    ref_out, ref_hidden = reference_step(input_step, last_hidden,
                                         encoder_output, params)

    assert out.shape == (B, V) and hidden.shape == (1, B, H)
    assert jnp.allclose(hidden, ref_hidden, atol=1e-4, rtol=1e-4), "hidden mismatch"
    assert jnp.allclose(out, ref_out, atol=2e-3, rtol=2e-2), "output mismatch"
    assert jnp.allclose(jnp.sum(out, axis=1), 1.0, atol=1e-5), "softmax not normalized"
    assert not bool(jnp.any(jnp.isnan(out))) and not bool(jnp.any(jnp.isnan(hidden)))

    # Second decode step reusing the packed weights / encoder (feedback item 1).
    input_step2 = jnp.argmax(out, axis=1)[None].astype(jnp.int32)
    out2, hidden2 = luong_decoder_step(input_step2, hidden, enc_packed,
                                       s_valid, weights)
    out2 = jax.block_until_ready(out2)
    assert out2.shape == (B, V) and hidden2.shape == (1, B, H)
    assert not bool(jnp.any(jnp.isnan(out2)))

    print("KERNEL_OK")
</pallas_src>

<mosaic_0001>
module attributes {stable_mosaic.version = 11 : i64} {
  func.func @kernel(%arg0: memref<8x256xf32, #tpu.memory_space<vmem>>, %arg1: memref<8x128x128xbf16, #tpu.memory_space<vmem>>, %arg2: memref<256x256xbf16, #tpu.memory_space<vmem>>, %arg3: memref<1x256xf32, #tpu.memory_space<vmem>>, %arg4: memref<128x128xbf16, #tpu.memory_space<vmem>>, %arg5: memref<1x128xf32, #tpu.memory_space<vmem>>, %arg6: memref<128x128xbf16, #tpu.memory_space<vmem>>, %arg7: memref<1x128xf32, #tpu.memory_space<vmem>>, %arg8: memref<128x128xbf16, #tpu.memory_space<vmem>>, %arg9: memref<128x128xbf16, #tpu.memory_space<vmem>>, %arg10: memref<1x128xf32, #tpu.memory_space<vmem>>, %arg11: memref<8x128xbf16, #tpu.memory_space<vmem>>, %arg12: memref<8x128xf32, #tpu.memory_space<vmem>>) attributes {dimension_semantics = [], scalar_prefetch = 0 : i64, scratch_operands = 0 : i64, tpu.core_type = #tpu.core_type<tc>} {
    %c0 = arith.constant 0 : index
    %c0_0 = arith.constant 0 : index
    %0 = vector.load %arg0[%c0, %c0_0] : memref<8x256xf32, #tpu.memory_space<vmem>>, vector<8x256xf32>
    %1 = vector.extract_strided_slice %0 {offsets = [0, 128], sizes = [8, 128], strides = [1, 1]} : vector<8x256xf32> to vector<8x128xf32>
    %2 = arith.truncf %0 : vector<8x256xf32> to vector<8x256xbf16>
    %c0_1 = arith.constant 0 : index
    %c0_2 = arith.constant 0 : index
    %3 = vector.load %arg2[%c0_1, %c0_2] : memref<256x256xbf16, #tpu.memory_space<vmem>>, vector<256x256xbf16>
    %cst = arith.constant dense<0.000000e+00> : vector<8x256xf32>
    %4 = tpu.matmul %2, %3, %cst {dimension_numbers = #tpu.dot_dimension_numbers<[1], [0], [0], [1], [0, 0, 1, 1], [], []>} : vector<8x256xbf16>, vector<256x256xbf16>, vector<8x256xf32> -> vector<8x256xf32>
    %c0_3 = arith.constant 0 : index
    %c0_4 = arith.constant 0 : index
    %5 = vector.load %arg3[%c0_3, %c0_4] : memref<1x256xf32, #tpu.memory_space<vmem>>, vector<1x256xf32>
    %6 = vector.broadcast %5 : vector<1x256xf32> to vector<8x256xf32>
    %7 = arith.addf %4, %6 : vector<8x256xf32>
    %8 = vector.extract_strided_slice %7 {offsets = [0, 0], sizes = [8, 128], strides = [1, 1]} : vector<8x256xf32> to vector<8x128xf32>
    %9 = arith.negf %8 : vector<8x128xf32>
    %10 = math.exp %9 : vector<8x128xf32>
    %cst_5 = arith.constant 1.000000e+00 : f32
    %11 = vector.broadcast %cst_5 : f32 to vector<8x128xf32>
    %12 = arith.addf %11, %10 : vector<8x128xf32>
    %13 = arith.divf %11, %12 : vector<8x128xf32>
    %14 = vector.extract_strided_slice %7 {offsets = [0, 128], sizes = [8, 128], strides = [1, 1]} : vector<8x256xf32> to vector<8x128xf32>
    %15 = arith.negf %14 : vector<8x128xf32>
    %16 = math.exp %15 : vector<8x128xf32>
    %cst_6 = arith.constant 1.000000e+00 : f32
    %17 = vector.broadcast %cst_6 : f32 to vector<8x128xf32>
    %18 = arith.addf %17, %16 : vector<8x128xf32>
    %19 = arith.divf %17, %18 : vector<8x128xf32>
    %20 = vector.extract_strided_slice %2 {offsets = [0, 0], sizes = [8, 128], strides = [1, 1]} : vector<8x256xbf16> to vector<8x128xbf16>
    %c0_7 = arith.constant 0 : index
    %c0_8 = arith.constant 0 : index
    %21 = vector.load %arg4[%c0_7, %c0_8] : memref<128x128xbf16, #tpu.memory_space<vmem>>, vector<128x128xbf16>
    %cst_9 = arith.constant dense<0.000000e+00> : vector<8x128xf32>
    %22 = tpu.matmul %20, %21, %cst_9 {dimension_numbers = #tpu.dot_dimension_numbers<[1], [0], [0], [1], [0, 0, 1, 1], [], []>} : vector<8x128xbf16>, vector<128x128xbf16>, vector<8x128xf32> -> vector<8x128xf32>
    %c0_10 = arith.constant 0 : index
    %c0_11 = arith.constant 0 : index
    %23 = vector.load %arg5[%c0_10, %c0_11] : memref<1x128xf32, #tpu.memory_space<vmem>>, vector<1x128xf32>
    %24 = vector.broadcast %23 : vector<1x128xf32> to vector<8x128xf32>
    %25 = arith.addf %22, %24 : vector<8x128xf32>
    %26 = vector.extract_strided_slice %2 {offsets = [0, 128], sizes = [8, 128], strides = [1, 1]} : vector<8x256xbf16> to vector<8x128xbf16>
    %c0_12 = arith.constant 0 : index
    %c0_13 = arith.constant 0 : index
    %27 = vector.load %arg6[%c0_12, %c0_13] : memref<128x128xbf16, #tpu.memory_space<vmem>>, vector<128x128xbf16>
    %cst_14 = arith.constant dense<0.000000e+00> : vector<8x128xf32>
    %28 = tpu.matmul %26, %27, %cst_14 {dimension_numbers = #tpu.dot_dimension_numbers<[1], [0], [0], [1], [0, 0, 1, 1], [], []>} : vector<8x128xbf16>, vector<128x128xbf16>, vector<8x128xf32> -> vector<8x128xf32>
    %c0_15 = arith.constant 0 : index
    %c0_16 = arith.constant 0 : index
    %29 = vector.load %arg7[%c0_15, %c0_16] : memref<1x128xf32, #tpu.memory_space<vmem>>, vector<1x128xf32>
    %30 = vector.broadcast %29 : vector<1x128xf32> to vector<8x128xf32>
    %31 = arith.addf %28, %30 : vector<8x128xf32>
    %32 = arith.mulf %13, %31 : vector<8x128xf32>
    %33 = arith.addf %25, %32 : vector<8x128xf32>
    %34 = math.tanh %33 : vector<8x128xf32>
    %cst_17 = arith.constant 1.000000e+00 : f32
    %35 = vector.broadcast %cst_17 : f32 to vector<8x128xf32>
    %36 = arith.subf %35, %19 : vector<8x128xf32>
    %37 = arith.mulf %36, %34 : vector<8x128xf32>
    %38 = arith.mulf %19, %1 : vector<8x128xf32>
    %39 = arith.addf %37, %38 : vector<8x128xf32>
    %c0_18 = arith.constant 0 : index
    %c0_19 = arith.constant 0 : index
    %40 = vector.load %arg12[%c0_18, %c0_19] : memref<8x128xf32, #tpu.memory_space<vmem>>, vector<8x128xf32>
    tpu.vector_store %arg12[%c0_18, %c0_19], %39 {strides = array<i32>} : memref<8x128xf32, #tpu.memory_space<vmem>>, vector<8x128xf32>,
    %c0_20 = arith.constant 0 : index
    %c0_21 = arith.constant 0 : index
    %c0_22 = arith.constant 0 : index
    %41 = vector.load %arg1[%c0_20, %c0_21, %c0_22] : memref<8x128x128xbf16, #tpu.memory_space<vmem>>, vector<8x128x128xbf16>
    %42 = arith.truncf %39 : vector<8x128xf32> to vector<8x128xbf16>
    %43 = vector.shape_cast %42 : vector<8x128xbf16> to vector<8x1x128xbf16>
    "tpu.trace_start"() <{level = 10 : i32, message = "bqh,bsh->bqs"}> : () -> ()
    %cst_23 = arith.constant dense<0.000000e+00> : vector<8x1x128xf32>
    %44 = tpu.matmul %43, %41, %cst_23 {dimension_numbers = #tpu.dot_dimension_numbers<[2], [2], [1], [1], [0, 0, 0, 1, 1, 1], [0], [0]>} : vector<8x1x128xbf16>, vector<8x128x128xbf16>, vector<8x1x128xf32> -> vector<8x1x128xf32>
    "tpu.trace_stop"() : () -> ()
    %45 = tpu.iota {dimensions = array<i32: 2>} : vector<8x1x128xi32>
    %c10_i32 = arith.constant 10 : i32
    %46 = vector.broadcast %c10_i32 : i32 to vector<8x1x128xi32>
    %47 = arith.cmpi slt, %45, %46 : vector<8x1x128xi32>
    %cst_24 = arith.constant -1.000000e+30 : f32
    %48 = vector.broadcast %cst_24 : f32 to vector<8x1x128xf32>
    %49 = arith.select %47, %44, %48 : vector<8x1x128xi1>, vector<8x1x128xf32>
    %cst_25 = arith.constant dense<0xFF800000> : vector<8x1xf32>
    %50 = vector.multi_reduction <maximumf>, %49, %cst_25 [2] : vector<8x1x128xf32> to vector<8x1xf32>
    %51 = vector.shape_cast %50 : vector<8x1xf32> to vector<8x1x1xf32>
    %52 = vector.broadcast %51 : vector<8x1x1xf32> to vector<8x1x128xf32>
    %53 = arith.subf %49, %52 : vector<8x1x128xf32>
    %54 = math.exp %53 : vector<8x1x128xf32>
    %cst_26 = arith.constant dense<0.000000e+00> : vector<8x1xf32>
    %55 = vector.multi_reduction <add>, %54, %cst_26 [2] : vector<8x1x128xf32> to vector<8x1xf32>
    %56 = vector.shape_cast %55 : vector<8x1xf32> to vector<8x1x1xf32>
    %57 = tpu.reciprocal %56 {approx = true} : vector<8x1x1xf32> -> vector<8x1x1xf32>
    %58 = arith.mulf %56, %57 : vector<8x1x1xf32>
    %cst_27 = arith.constant 2.000000e+00 : f32
    %59 = vector.broadcast %cst_27 : f32 to vector<8x1x1xf32>
    %60 = arith.subf %59, %58 : vector<8x1x1xf32>
    %61 = arith.mulf %57, %60 : vector<8x1x1xf32>
    %62 = vector.broadcast %61 : vector<8x1x1xf32> to vector<8x1x128xf32>
    %63 = arith.mulf %54, %62 : vector<8x1x128xf32>
    %64 = arith.truncf %63 : vector<8x1x128xf32> to vector<8x1x128xbf16>
    "tpu.trace_start"() <{level = 10 : i32, message = "bqs,bsh->bqh"}> : () -> ()
    %cst_28 = arith.constant dense<0.000000e+00> : vector<8x1x128xf32>
    %65 = tpu.matmul %64, %41, %cst_28 {dimension_numbers = #tpu.dot_dimension_numbers<[2], [1], [1], [2], [0, 0, 0, 1, 1, 2], [0], [0]>} : vector<8x1x128xbf16>, vector<8x128x128xbf16>, vector<8x1x128xf32> -> vector<8x1x128xf32>
    "tpu.trace_stop"() : () -> ()
    %66 = vector.shape_cast %65 : vector<8x1x128xf32> to vector<8x128xf32>
    %67 = arith.truncf %39 : vector<8x128xf32> to vector<8x128xbf16>
    %c0_29 = arith.constant 0 : index
    %c0_30 = arith.constant 0 : index
    %68 = vector.load %arg8[%c0_29, %c0_30] : memref<128x128xbf16, #tpu.memory_space<vmem>>, vector<128x128xbf16>
    %cst_31 = arith.constant dense<0.000000e+00> : vector<8x128xf32>
    %69 = tpu.matmul %67, %68, %cst_31 {dimension_numbers = #tpu.dot_dimension_numbers<[1], [0], [0], [1], [0, 0, 1, 1], [], []>} : vector<8x128xbf16>, vector<128x128xbf16>, vector<8x128xf32> -> vector<8x128xf32>
    %70 = arith.truncf %66 : vector<8x128xf32> to vector<8x128xbf16>
    %c0_32 = arith.constant 0 : index
    %c0_33 = arith.constant 0 : index
    %71 = vector.load %arg9[%c0_32, %c0_33] : memref<128x128xbf16, #tpu.memory_space<vmem>>, vector<128x128xbf16>
    %cst_34 = arith.constant dense<0.000000e+00> : vector<8x128xf32>
    %72 = tpu.matmul %70, %71, %cst_34 {dimension_numbers = #tpu.dot_dimension_numbers<[1], [0], [0], [1], [0, 0, 1, 1], [], []>} : vector<8x128xbf16>, vector<128x128xbf16>, vector<8x128xf32> -> vector<8x128xf32>
    %73 = arith.addf %69, %72 : vector<8x128xf32>
    %c0_35 = arith.constant 0 : index
    %c0_36 = arith.constant 0 : index
    %74 = vector.load %arg10[%c0_35, %c0_36] : memref<1x128xf32, #tpu.memory_space<vmem>>, vector<1x128xf32>
    %75 = vector.broadcast %74 : vector<1x128xf32> to vector<8x128xf32>
    %76 = arith.addf %73, %75 : vector<8x128xf32>
    %77 = math.tanh %76 : vector<8x128xf32>
    %78 = arith.truncf %77 : vector<8x128xf32> to vector<8x128xbf16>
    %c0_37 = arith.constant 0 : index
    %c0_38 = arith.constant 0 : index
    %79 = vector.load %arg11[%c0_37, %c0_38] : memref<8x128xbf16, #tpu.memory_space<vmem>>, vector<8x128xbf16>
    tpu.vector_store %arg11[%c0_37, %c0_38], %78 {strides = array<i32>} : memref<8x128xbf16, #tpu.memory_space<vmem>>, vector<8x128xbf16>,
    return
  }
}

</mosaic_0001>

<llo_original>
// kernel: tpu_custom_call.1
$region0: #{tpu_custom_call.1}
  #allocation0 [shape = 'u32[]', space=smem, size = 0x4, offset = 0x4, fixed_abs, tag = 'smem constant byte address 0x4 - core index']
  #allocation1 [shape = 'u32[72,128]{1,0:T(1,128)}', space=vmem, size = 0x9000, scoped, tag = 'internal scratch']
  %s0 = inlined_call_operand.hbm [shape: f32[8,256], index: 0, kind: input, shape index: {}]
  %s1 = inlined_call_operand.hbm [shape: bf16[8,128,128], index: 1, kind: input, shape index: {}]
  %s2 = inlined_call_operand.hbm [shape: bf16[256,256], index: 2, kind: input, shape index: {}]
  %s3 = inlined_call_operand.vmem [shape: f32[1,256], index: 3, kind: input, shape index: {}]
  %s4 = inlined_call_operand.hbm [shape: bf16[128,128], index: 4, kind: input, shape index: {}]
  %s5 = inlined_call_operand.vmem [shape: f32[1,128], index: 5, kind: input, shape index: {}]
  %s6 = inlined_call_operand.hbm [shape: bf16[128,128], index: 6, kind: input, shape index: {}]
  %s7 = inlined_call_operand.vmem [shape: f32[1,128], index: 7, kind: input, shape index: {}]
  %s8 = inlined_call_operand.hbm [shape: bf16[128,128], index: 8, kind: input, shape index: {}]
  %s9 = inlined_call_operand.hbm [shape: bf16[128,128], index: 9, kind: input, shape index: {}]
  %s10 = inlined_call_operand.vmem [shape: f32[1,128], index: 10, kind: input, shape index: {}]
  %s11 = inlined_call_operand.hbm [shape: bf16[8,128], index: 11, kind: output, shape index: {0}]
  %s12 = inlined_call_operand.hbm [shape: f32[8,128], index: 12, kind: output, shape index: {1}]
  %13 = xla_tuple %s11, %s12
  %s14 = sld [smem:[#allocation0]]
  $region90: #{tpu_custom_call.1} parent=0
    _
  %s16 = ssub.s32 1, %s14
  %s17 = scalar_select 0, %s16, %s14
  $region1: #{tpu_custom_call.1} parent=0
    #allocation2 [shape = 'u8[8192]{0}', space=vmem, size = 0x2000, scoped, tag = 'input window, operand 0, single buffered']
    #allocation3 [shape = 's32[1]{0}', space=sflag, size = 0x4, scoped, tag = 'scoped memory for tpu_custom_call.1']
    #allocation4 [shape = 's32[1]{0}', space=sflag, size = 0x4, scoped, tag = 'scoped memory for tpu_custom_call.1']
    #allocation5 [shape = 'u8[262144]{0}', space=vmem, size = 0x40000, scoped, tag = 'input window, operand 1, single buffered']
    #allocation6 [shape = 's32[1]{0}', space=sflag, size = 0x4, scoped, tag = 'scoped memory for tpu_custom_call.1']
    #allocation7 [shape = 'u8[131072]{0}', space=vmem, size = 0x20000, scoped, tag = 'input window, operand 2, single buffered']
    #allocation8 [shape = 'u8[32768]{0}', space=vmem, size = 0x8000, scoped, tag = 'input window, operand 4, single buffered']
    #allocation9 [shape = 's32[1]{0}', space=sflag, size = 0x4, scoped, tag = 'scoped memory for tpu_custom_call.1']
    #allocation10 [shape = 'u8[32768]{0}', space=vmem, size = 0x8000, scoped, tag = 'input window, operand 6, single buffered']
    #allocation11 [shape = 'u8[32768]{0}', space=vmem, size = 0x8000, scoped, tag = 'input window, operand 8, single buffered']
    #allocation12 [shape = 's32[1]{0}', space=sflag, size = 0x4, scoped, tag = 'scoped memory for tpu_custom_call.1']
    #allocation13 [shape = 'u8[32768]{0}', space=vmem, size = 0x8000, scoped, tag = 'input window, operand 9, single buffered']
    #allocation14 [shape = 'u8[2048]{0}', space=vmem, size = 0x800, scoped, tag = 'output window, operand 0, single buffered']
    #allocation15 [shape = 'u8[4096]{0}', space=vmem, size = 0x1000, scoped, tag = 'output window, operand 1, single buffered']
    #allocation16 [shape = 's32[1]{0}', space=sflag, size = 0x4, scoped, tag = 'scoped memory for tpu_custom_call.1']
    %18 = vsyncpa [#allocation3], 0
    %19 = vsyncpa [#allocation6], 0
    %20 = vsyncpa [#allocation9], 0
    %21 = vsyncpa [#allocation12], 0
    %22 = vsyncpa [#allocation4], 0
    %23 = vsyncpa [#allocation16], 0
    // Predicated region
    $region2: #{tpu_custom_call.1} parent=1 // pred_check
      _
    $region3: #{tpu_custom_call.1} parent=1 // pred_check_branch
      %25 = sbr.rel (0) target = $region5
    $region4: #{tpu_custom_call.1} parent=1 // pred_region
      %27 = vsyncadd [#allocation3], 0
      %s29 = sshll.u32 %s0, 4
      %s30 = int_to_ptr.hbm [resolvable:$true] %s29
      %s31 = sshll.u32 [#allocation2], 4
      %s32 = int_to_ptr.vmem [resolvable:$true] %s31
      %34 = dma.hbm_to_vmem [thread:$0]  %s30, 256, %s32, [#allocation3]
    $region5: #{tpu_custom_call.1} parent=1 // pred_fallthru
      _
    // Predicated region
    $region6: #{tpu_custom_call.1} parent=1 // pred_check
      _
    $region7: #{tpu_custom_call.1} parent=1 // pred_check_branch
      %36 = sbr.rel (0) target = $region9
    $region8: #{tpu_custom_call.1} parent=1 // pred_region
      %38 = vsyncadd [#allocation6], 0
      %s39 = sshll.u32 %s1, 4
      %s40 = int_to_ptr.hbm [resolvable:$true] %s39
      %s41 = sshll.u32 [#allocation5], 4
      %s42 = int_to_ptr.vmem [resolvable:$true] %s41
      %47 = dma.hbm_to_vmem [thread:$0]  %s40, 8192, %s42, [#allocation6], 64, 64, 4
    $region9: #{tpu_custom_call.1} parent=1 // pred_fallthru
      _
    // Predicated region
    $region10: #{tpu_custom_call.1} parent=1 // pred_check
      _
    $region11: #{tpu_custom_call.1} parent=1 // pred_check_branch
      %49 = sbr.rel (0) target = $region13
    $region12: #{tpu_custom_call.1} parent=1 // pred_region
      %51 = vsyncadd [#allocation6], 0
      %s52 = sshll.u32 %s2, 4
      %s53 = int_to_ptr.hbm [resolvable:$true] %s52
      %s54 = sshll.u32 [#allocation7], 4
      %s55 = int_to_ptr.vmem [resolvable:$true] %s54
      %60 = dma.hbm_to_vmem [thread:$0]  %s53, 4096, %s55, [#allocation6], 128, 128, 8
    $region13: #{tpu_custom_call.1} parent=1 // pred_fallthru
      _
    // Predicated region
    $region14: #{tpu_custom_call.1} parent=1 // pred_check
      _
    $region15: #{tpu_custom_call.1} parent=1 // pred_check_branch
      %62 = sbr.rel (0) target = $region17
    $region16: #{tpu_custom_call.1} parent=1 // pred_region
      _
    $region17: #{tpu_custom_call.1} parent=1 // pred_fallthru
      _
    // Predicated region
    $region18: #{tpu_custom_call.1} parent=1 // pred_check
      _
    $region19: #{tpu_custom_call.1} parent=1 // pred_check_branch
      %64 = sbr.rel (0) target = $region21
    $region20: #{tpu_custom_call.1} parent=1 // pred_region
      %66 = vsyncadd [#allocation9], 0
      %s67 = sshll.u32 %s4, 4
      %s68 = int_to_ptr.hbm [resolvable:$true] %s67
      %s69 = sshll.u32 [#allocation8], 4
      %s70 = int_to_ptr.vmem [resolvable:$true] %s69
      %75 = dma.hbm_to_vmem [thread:$0]  %s68, 1024, %s70, [#allocation9], 64, 64, 4
    $region21: #{tpu_custom_call.1} parent=1 // pred_fallthru
      _
    // Predicated region
    $region22: #{tpu_custom_call.1} parent=1 // pred_check
      _
    $region23: #{tpu_custom_call.1} parent=1 // pred_check_branch
      %77 = sbr.rel (0) target = $region25
    $region24: #{tpu_custom_call.1} parent=1 // pred_region
      _
    $region25: #{tpu_custom_call.1} parent=1 // pred_fallthru
      _
    // Predicated region
    $region26: #{tpu_custom_call.1} parent=1 // pred_check
      _
    $region27: #{tpu_custom_call.1} parent=1 // pred_check_branch
      %79 = sbr.rel (0) target = $region29
    $region28: #{tpu_custom_call.1} parent=1 // pred_region
      %81 = vsyncadd [#allocation9], 0
      %s82 = sshll.u32 %s6, 4
      %s83 = int_to_ptr.hbm [resolvable:$true] %s82
      %s84 = sshll.u32 [#allocation10], 4
      %s85 = int_to_ptr.vmem [resolvable:$true] %s84
      %90 = dma.hbm_to_vmem [thread:$0]  %s83, 1024, %s85, [#allocation9], 64, 64, 4
    $region29: #{tpu_custom_call.1} parent=1 // pred_fallthru
      _
    // Predicated region
    $region30: #{tpu_custom_call.1} parent=1 // pred_check
      _
    $region31: #{tpu_custom_call.1} parent=1 // pred_check_branch
      %92 = sbr.rel (0) target = $region33
    $region32: #{tpu_custom_call.1} parent=1 // pred_region
      _
    $region33: #{tpu_custom_call.1} parent=1 // pred_fallthru
      _
    // Predicated region
    $region34: #{tpu_custom_call.1} parent=1 // pred_check
      _
    $region35: #{tpu_custom_call.1} parent=1 // pred_check_branch
      %94 = sbr.rel (0) target = $region37
    $region36: #{tpu_custom_call.1} parent=1 // pred_region
      %96 = vsyncadd [#allocation12], 0
      %s97 = sshll.u32 %s8, 4
      %s98 = int_to_ptr.hbm [resolvable:$true] %s97
      %s99 = sshll.u32 [#allocation11], 4
      %s100 = int_to_ptr.vmem [resolvable:$true] %s99
      %105 = dma.hbm_to_vmem [thread:$0]  %s98, 1024, %s100, [#allocation12], 64, 64, 4
    $region37: #{tpu_custom_call.1} parent=1 // pred_fallthru
      _
    // Predicated region
    $region38: #{tpu_custom_call.1} parent=1 // pred_check
      _
    $region39: #{tpu_custom_call.1} parent=1 // pred_check_branch
      %107 = sbr.rel (0) target = $region41
    $region40: #{tpu_custom_call.1} parent=1 // pred_region
      %109 = vsyncadd [#allocation12], 0
      %s110 = sshll.u32 %s9, 4
      %s111 = int_to_ptr.hbm [resolvable:$true] %s110
      %s112 = sshll.u32 [#allocation13], 4
      %s113 = int_to_ptr.vmem [resolvable:$true] %s112
      %118 = dma.hbm_to_vmem [thread:$0]  %s111, 1024, %s113, [#allocation12], 64, 64, 4
    $region41: #{tpu_custom_call.1} parent=1 // pred_fallthru
      _
    // Predicated region
    $region42: #{tpu_custom_call.1} parent=1 // pred_check
      _
    $region43: #{tpu_custom_call.1} parent=1 // pred_check_branch
      %120 = sbr.rel (0) target = $region45
    $region44: #{tpu_custom_call.1} parent=1 // pred_region
      _
    $region45: #{tpu_custom_call.1} parent=1 // pred_fallthru
      _
    // Predicated region
    $region46: #{tpu_custom_call.1} parent=1 // pred_check
      _
    $region47: #{tpu_custom_call.1} parent=1 // pred_check_branch
      %122 = sbr.rel (0) target = $region49
    $region48: #{tpu_custom_call.1} parent=1 // pred_region
      %124 = dma.done [#allocation3], 256
    $region49: #{tpu_custom_call.1} parent=1 // pred_fallthru
      _
    // Predicated region
    $region50: #{tpu_custom_call.1} parent=1 // pred_check
      _
    $region51: #{tpu_custom_call.1} parent=1 // pred_check_branch
      %126 = sbr.rel (0) target = $region53
    $region52: #{tpu_custom_call.1} parent=1 // pred_region
      %128 = dma.done [#allocation6], 8192
    $region53: #{tpu_custom_call.1} parent=1 // pred_fallthru
      _
    // Predicated region
    $region54: #{tpu_custom_call.1} parent=1 // pred_check
      _
    $region55: #{tpu_custom_call.1} parent=1 // pred_check_branch
      %130 = sbr.rel (0) target = $region57
    $region56: #{tpu_custom_call.1} parent=1 // pred_region
      %132 = dma.done [#allocation6], 4096
    $region57: #{tpu_custom_call.1} parent=1 // pred_fallthru
      _
    // Predicated region
    $region58: #{tpu_custom_call.1} parent=1 // pred_check
      _
    $region59: #{tpu_custom_call.1} parent=1 // pred_check_branch
      %134 = sbr.rel (0) target = $region61
    $region60: #{tpu_custom_call.1} parent=1 // pred_region
      %136 = dma.done [#allocation9], 1024
    $region61: #{tpu_custom_call.1} parent=1 // pred_fallthru
      _
    // Predicated region
    $region62: #{tpu_custom_call.1} parent=1 // pred_check
      _
    $region63: #{tpu_custom_call.1} parent=1 // pred_check_branch
      %138 = sbr.rel (0) target = $region65
    $region64: #{tpu_custom_call.1} parent=1 // pred_region
      %140 = dma.done [#allocation9], 1024
    $region65: #{tpu_custom_call.1} parent=1 // pred_fallthru
      _
    // Predicated region
    $region66: #{tpu_custom_call.1} parent=1 // pred_check
      _
    $region67: #{tpu_custom_call.1} parent=1 // pred_check_branch
      %142 = sbr.rel (0) target = $region69
    $region68: #{tpu_custom_call.1} parent=1 // pred_region
      %144 = dma.done [#allocation12], 1024
    $region69: #{tpu_custom_call.1} parent=1 // pred_fallthru
      _
    // Predicated region
    $region70: #{tpu_custom_call.1} parent=1 // pred_check
      _
    $region71: #{tpu_custom_call.1} parent=1 // pred_check_branch
      %146 = sbr.rel (0) target = $region73
    $region72: #{tpu_custom_call.1} parent=1 // pred_region
      %148 = dma.done [#allocation12], 1024
    $region73: #{tpu_custom_call.1} parent=1 // pred_fallthru
      _
    %v149 = vld [vmem:[#allocation2] sm:$0xff]
    %v150 = vld [vmem:[#allocation2 + $0x8] sm:$0xff]
    %v151 = vpack.c.bf16 %v150, %v149
    %v152 = vld [vmem:[#allocation7] sm:$0xff]
    %v153 = vld [vmem:[#allocation7 + $0x8] sm:$0xff]
    %v154 = vld [vmem:[#allocation7 + $0x10] sm:$0xff]
    %v155 = vld [vmem:[#allocation7 + $0x18] sm:$0xff]
    %v156 = vld [vmem:[#allocation7 + $0x20] sm:$0xff]
    %v157 = vld [vmem:[#allocation7 + $0x28] sm:$0xff]
    %v158 = vld [vmem:[#allocation7 + $0x30] sm:$0xff]
    %v159 = vld [vmem:[#allocation7 + $0x38] sm:$0xff]
    %v160 = vld [vmem:[#allocation7 + $0x40] sm:$0xff]
    %v161 = vld [vmem:[#allocation7 + $0x48] sm:$0xff]
    %v162 = vld [vmem:[#allocation7 + $0x50] sm:$0xff]
    %v163 = vld [vmem:[#allocation7 + $0x58] sm:$0xff]
    %v164 = vld [vmem:[#allocation7 + $0x60] sm:$0xff]
    %v165 = vld [vmem:[#allocation7 + $0x68] sm:$0xff]
    %v166 = vld [vmem:[#allocation7 + $0x70] sm:$0xff]
    %v167 = vld [vmem:[#allocation7 + $0x78] sm:$0xff]
    %v168 = vld [vmem:[#allocation7 + $0x80] sm:$0xff]
    %v169 = vld [vmem:[#allocation7 + $0x88] sm:$0xff]
    %v170 = vld [vmem:[#allocation7 + $0x90] sm:$0xff]
    %v171 = vld [vmem:[#allocation7 + $0x98] sm:$0xff]
    %v172 = vld [vmem:[#allocation7 + $0xa0] sm:$0xff]
    %v173 = vld [vmem:[#allocation7 + $0xa8] sm:$0xff]
    %v174 = vld [vmem:[#allocation7 + $0xb0] sm:$0xff]
    %v175 = vld [vmem:[#allocation7 + $0xb8] sm:$0xff]
    %v176 = vld [vmem:[#allocation7 + $0xc0] sm:$0xff]
    %v177 = vld [vmem:[#allocation7 + $0xc8] sm:$0xff]
    %v178 = vld [vmem:[#allocation7 + $0xd0] sm:$0xff]
    %v179 = vld [vmem:[#allocation7 + $0xd8] sm:$0xff]
    %v180 = vld [vmem:[#allocation7 + $0xe0] sm:$0xff]
    %v181 = vld [vmem:[#allocation7 + $0xe8] sm:$0xff]
    %v182 = vld [vmem:[#allocation7 + $0xf0] sm:$0xff]
    %v183 = vld [vmem:[#allocation7 + $0xf8] sm:$0xff]
    %v184 = vld [vmem:[%s3] sm:$0x3]
    %v186 = vperm.slane %v184, 0
    %v187 = vperm.slane %v184, 1
    %v191 = vunpack.c.l.b16 %v151
    %v192 = vunpack.c.h.b16 %v151
    %v193 = vpack.c.b16 %v191, %v191
    %v194 = vpack.c.b16 %v192, %v192
    %v229 = vunpack.c.l.b16 %v152
    %v230 = vunpack.c.h.b16 %v152
    %v231 = vunpack.c.l.b16 %v153
    %v232 = vunpack.c.h.b16 %v153
    %v233 = vunpack.c.l.b16 %v154
    %v234 = vunpack.c.h.b16 %v154
    %v235 = vunpack.c.l.b16 %v155
    %v236 = vunpack.c.h.b16 %v155
    %v237 = vunpack.c.l.b16 %v156
    %v238 = vunpack.c.h.b16 %v156
    %v239 = vunpack.c.l.b16 %v157
    %v240 = vunpack.c.h.b16 %v157
    %v241 = vunpack.c.l.b16 %v158
    %v242 = vunpack.c.h.b16 %v158
    %v243 = vunpack.c.l.b16 %v159
    %v244 = vunpack.c.h.b16 %v159
    %v245 = vunpack.c.l.b16 %v160
    %v246 = vunpack.c.h.b16 %v160
    %v247 = vunpack.c.l.b16 %v161
    %v248 = vunpack.c.h.b16 %v161
    %v249 = vunpack.c.l.b16 %v162
    %v250 = vunpack.c.h.b16 %v162
    %v251 = vunpack.c.l.b16 %v163
    %v252 = vunpack.c.h.b16 %v163
    %v253 = vunpack.c.l.b16 %v164
    %v254 = vunpack.c.h.b16 %v164
    %v255 = vunpack.c.l.b16 %v165
    %v256 = vunpack.c.h.b16 %v165
    %v257 = vunpack.c.l.b16 %v166
    %v258 = vunpack.c.h.b16 %v166
    %v259 = vunpack.c.l.b16 %v167
    %v260 = vunpack.c.h.b16 %v167
    %v261 = vunpack.c.l.b16 %v168
    %v262 = vunpack.c.h.b16 %v168
    %v263 = vunpack.c.l.b16 %v169
    %v264 = vunpack.c.h.b16 %v169
    %v265 = vunpack.c.l.b16 %v170
    %v266 = vunpack.c.h.b16 %v170
    %v267 = vunpack.c.l.b16 %v171
    %v268 = vunpack.c.h.b16 %v171
    %v269 = vunpack.c.l.b16 %v172
    %v270 = vunpack.c.h.b16 %v172
    %v271 = vunpack.c.l.b16 %v173
    %v272 = vunpack.c.h.b16 %v173
    %v273 = vunpack.c.l.b16 %v174
    %v274 = vunpack.c.h.b16 %v174
    %v275 = vunpack.c.l.b16 %v175
    %v276 = vunpack.c.h.b16 %v175
    %v277 = vunpack.c.l.b16 %v176
    %v278 = vunpack.c.h.b16 %v176
    %v279 = vunpack.c.l.b16 %v177
    %v280 = vunpack.c.h.b16 %v177
    %v281 = vunpack.c.l.b16 %v178
    %v282 = vunpack.c.h.b16 %v178
    %v283 = vunpack.c.l.b16 %v179
    %v284 = vunpack.c.h.b16 %v179
    %v285 = vunpack.c.l.b16 %v180
    %v286 = vunpack.c.h.b16 %v180
    %v287 = vunpack.c.l.b16 %v181
    %v288 = vunpack.c.h.b16 %v181
    %v289 = vunpack.c.l.b16 %v182
    %v290 = vunpack.c.h.b16 %v182
    %v291 = vunpack.c.l.b16 %v183
    %v292 = vunpack.c.h.b16 %v183
    %v293 = vpack.c.b16 %v231, %v229
    %v294 = vpack.c.b16 %v232, %v230
    %v295 = vpack.c.b16 %v235, %v233
    %v296 = vpack.c.b16 %v236, %v234
    %v297 = vpack.c.b16 %v239, %v237
    %v298 = vpack.c.b16 %v240, %v238
    %v299 = vpack.c.b16 %v243, %v241
    %v300 = vpack.c.b16 %v244, %v242
    %v301 = vpack.c.b16 %v247, %v245
    %v302 = vpack.c.b16 %v248, %v246
    %v303 = vpack.c.b16 %v251, %v249
    %v304 = vpack.c.b16 %v252, %v250
    %v305 = vpack.c.b16 %v255, %v253
    %v306 = vpack.c.b16 %v256, %v254
    %v307 = vpack.c.b16 %v259, %v257
    %v308 = vpack.c.b16 %v260, %v258
    %v309 = vpack.c.b16 %v263, %v261
    %v310 = vpack.c.b16 %v264, %v262
    %v311 = vpack.c.b16 %v267, %v265
    %v312 = vpack.c.b16 %v268, %v266
    %v313 = vpack.c.b16 %v271, %v269
    %v314 = vpack.c.b16 %v272, %v270
    %v315 = vpack.c.b16 %v275, %v273
    %v316 = vpack.c.b16 %v276, %v274
    %v317 = vpack.c.b16 %v279, %v277
    %v318 = vpack.c.b16 %v280, %v278
    %v319 = vpack.c.b16 %v283, %v281
    %v320 = vpack.c.b16 %v284, %v282
    %v321 = vpack.c.b16 %v287, %v285
    %v322 = vpack.c.b16 %v288, %v286
    %v323 = vpack.c.b16 %v291, %v289
    %v324 = vpack.c.b16 %v292, %v290
    %357 = vmatpush.bf16.msra.mxu0 %v307
    %358 = vmatpush.bf16.msra.mxu0 %v305
    %359 = vmatpush.bf16.msra.mxu0 %v303
    %360 = vmatpush.bf16.msra.mxu0 %v301
    %361 = vmatpush.bf16.msra.mxu0 %v299
    %362 = vmatpush.bf16.msra.mxu0 %v297
    %363 = vmatpush.bf16.msra.mxu0 %v295
    %364 = vmatpush.bf16.msra.mxu0 %v293
    %365 = vmatmul.bf16.gmra.mxu0 %v193
    %v366 = vpop.f32.mrf.mxu0
    %v367 = vadd.f32 %v186, %v366
    %v368 = vpop.f32.mrf.mxu0
    %369 = vdwg.mxu0
    %370 = vmatpush.bf16.msra.mxu0 %v323
    %371 = vmatpush.bf16.msra.mxu0 %v321
    %372 = vmatpush.bf16.msra.mxu0 %v319
    %373 = vmatpush.bf16.msra.mxu0 %v317
    %374 = vmatpush.bf16.msra.mxu0 %v315
    %375 = vmatpush.bf16.msra.mxu0 %v313
    %376 = vmatpush.bf16.msra.mxu0 %v311
    %377 = vmatpush.bf16.msra.mxu0 %v309
    %378 = vmatmul.bf16.gmra.mxu0 %v194
    %v379 = vpop.f32.mrf.mxu0
    %v380 = vadd.f32 %v367, %v379
    %v381 = vpop.f32.mrf.mxu0
    %382 = vdwg.mxu0
    %383 = vmatpush.bf16.msra.mxu0 %v308
    %384 = vmatpush.bf16.msra.mxu0 %v306
    %385 = vmatpush.bf16.msra.mxu0 %v304
    %386 = vmatpush.bf16.msra.mxu0 %v302
    %387 = vmatpush.bf16.msra.mxu0 %v300
    %388 = vmatpush.bf16.msra.mxu0 %v298
    %389 = vmatpush.bf16.msra.mxu0 %v296
    %390 = vmatpush.bf16.msra.mxu0 %v294
    %391 = vmatmul.bf16.gmra.mxu0 %v193
    %v392 = vpop.f32.mrf.mxu0
    %v393 = vadd.f32 %v187, %v392
    %v394 = vpop.f32.mrf.mxu0
    %395 = vdwg.mxu0
    %396 = vmatpush.bf16.msra.mxu0 %v324
    %397 = vmatpush.bf16.msra.mxu0 %v322
    %398 = vmatpush.bf16.msra.mxu0 %v320
    %399 = vmatpush.bf16.msra.mxu0 %v318
    %400 = vmatpush.bf16.msra.mxu0 %v316
    %401 = vmatpush.bf16.msra.mxu0 %v314
    %402 = vmatpush.bf16.msra.mxu0 %v312
    %403 = vmatpush.bf16.msra.mxu0 %v310
    %404 = vmatmul.bf16.gmra.mxu0 %v194
    %v405 = vpop.f32.mrf.mxu0
    %v406 = vadd.f32 %v393, %v405
    %v407 = vpop.f32.mrf.mxu0
    %408 = vdwg.mxu0
    %v409 = vxor.u32 %v380, 2147483648
    %v410 = vmul.f32 %v409, 1.442695
    %v411 = vpow.pop %v410
    %v412 = vadd.f32 %v411, 1.0
    %v413 = vrcp.pop %v412
    %v414 = vmul.f32 %v412, %v413
    %v415 = vsub.f32 1.0, %v414
    %v416 = vmul.f32 %v413, %v415
    %v417 = vadd.f32 %v413, %v416
    %vm418 = vweird.f32 %v412
    %vm419 = vweird.f32 %v413
    %vm420 = vmor %vm418, %vm419
    %v421 = vsel %vm420, %v413, %v417
    %v422 = vand.u32 2147483647, %v412
    %vm423 = vcmp.eq.f32.partialorder %v422, 8.507059e+37
    %v424 = vand.u32 %v412, 2147483648
    %v425 = vor.u32 1.1754944e-38, %v424
    %v426 = vsel %vm423, %v425, %v421
    %v427 = vmul.f32 1.0, %v426
    %v428 = vxor.u32 %v406, 2147483648
    %v429 = vmul.f32 %v428, 1.442695
    %v430 = vpow.pop %v429
    %v431 = vadd.f32 %v430, 1.0
    %v432 = vrcp.pop %v431
    %v433 = vmul.f32 %v431, %v432
    %v434 = vsub.f32 1.0, %v433
    %v435 = vmul.f32 %v432, %v434
    %v436 = vadd.f32 %v432, %v435
    %vm437 = vweird.f32 %v431
    %vm438 = vweird.f32 %v432
    %vm439 = vmor %vm437, %vm438
    %v440 = vsel %vm439, %v432, %v436
    %v441 = vand.u32 2147483647, %v431
    %vm442 = vcmp.eq.f32.partialorder %v441, 8.507059e+37
    %v443 = vand.u32 %v431, 2147483648
    %v444 = vor.u32 1.1754944e-38, %v443
    %v445 = vsel %vm442, %v444, %v440
    %v446 = vmul.f32 1.0, %v445
    %v447 = vld [vmem:[#allocation8] sm:$0xf]
    %v448 = vld [vmem:[#allocation8 + $0x4] sm:$0xf]
    %v449 = vld [vmem:[#allocation8 + $0x8] sm:$0xf]
    %v450 = vld [vmem:[#allocation8 + $0xc] sm:$0xf]
    %v451 = vld [vmem:[#allocation8 + $0x10] sm:$0xf]
    %v452 = vld [vmem:[#allocation8 + $0x14] sm:$0xf]
    %v453 = vld [vmem:[#allocation8 + $0x18] sm:$0xf]
    %v454 = vld [vmem:[#allocation8 + $0x1c] sm:$0xf]
    %v455 = vld [vmem:[#allocation8 + $0x20] sm:$0xf]
    %v456 = vld [vmem:[#allocation8 + $0x24] sm:$0xf]
    %v457 = vld [vmem:[#allocation8 + $0x28] sm:$0xf]
    %v458 = vld [vmem:[#allocation8 + $0x2c] sm:$0xf]
    %v459 = vld [vmem:[#allocation8 + $0x30] sm:$0xf]
    %v460 = vld [vmem:[#allocation8 + $0x34] sm:$0xf]
    %v461 = vld [vmem:[#allocation8 + $0x38] sm:$0xf]
    %v462 = vld [vmem:[#allocation8 + $0x3c] sm:$0xf]
    %v463 = vld [vmem:[%s5] sm:$0x1]
    %v465 = vperm.slane %v463, 0
    %v483 = vunpack.c.l.b16 %v447
    %v484 = vunpack.c.l.b16 %v448
    %v485 = vunpack.c.l.b16 %v449
    %v486 = vunpack.c.l.b16 %v450
    %v487 = vunpack.c.l.b16 %v451
    %v488 = vunpack.c.l.b16 %v452
    %v489 = vunpack.c.l.b16 %v453
    %v490 = vunpack.c.l.b16 %v454
    %v491 = vunpack.c.l.b16 %v455
    %v492 = vunpack.c.l.b16 %v456
    %v493 = vunpack.c.l.b16 %v457
    %v494 = vunpack.c.l.b16 %v458
    %v495 = vunpack.c.l.b16 %v459
    %v496 = vunpack.c.l.b16 %v460
    %v497 = vunpack.c.l.b16 %v461
    %v498 = vunpack.c.l.b16 %v462
    %v499 = vpack.c.b16 %v484, %v483
    %v500 = vpack.c.b16 %v486, %v485
    %v501 = vpack.c.b16 %v488, %v487
    %v502 = vpack.c.b16 %v490, %v489
    %v503 = vpack.c.b16 %v492, %v491
    %v504 = vpack.c.b16 %v494, %v493
    %v505 = vpack.c.b16 %v496, %v495
    %v506 = vpack.c.b16 %v498, %v497
    %515 = vmatpush.bf16.msra.mxu0 %v506
    %516 = vmatpush.bf16.msra.mxu0 %v505
    %517 = vmatpush.bf16.msra.mxu0 %v504
    %518 = vmatpush.bf16.msra.mxu0 %v503
    %519 = vmatpush.bf16.msra.mxu0 %v502
    %520 = vmatpush.bf16.msra.mxu0 %v501
    %521 = vmatpush.bf16.msra.mxu0 %v500
    %522 = vmatpush.bf16.msra.mxu0 %v499
    %523 = vmatmul.bf16.gmra.mxu0 %v151
    %v524 = vpop.f32.mrf.mxu0
    %v525 = vadd.f32 %v465, %v524
    %v526 = vpop.f32.mrf.mxu0
    %527 = vdwg.mxu0
    %v528 = vld [vmem:[#allocation10] sm:$0xf]
    %v529 = vld [vmem:[#allocation10 + $0x4] sm:$0xf]
    %v530 = vld [vmem:[#allocation10 + $0x8] sm:$0xf]
    %v531 = vld [vmem:[#allocation10 + $0xc] sm:$0xf]
    %v532 = vld [vmem:[#allocation10 + $0x10] sm:$0xf]
    %v533 = vld [vmem:[#allocation10 + $0x14] sm:$0xf]
    %v534 = vld [vmem:[#allocation10 + $0x18] sm:$0xf]
    %v535 = vld [vmem:[#allocation10 + $0x1c] sm:$0xf]
    %v536 = vld [vmem:[#allocation10 + $0x20] sm:$0xf]
    %v537 = vld [vmem:[#allocation10 + $0x24] sm:$0xf]
    %v538 = vld [vmem:[#allocation10 + $0x28] sm:$0xf]
    %v539 = vld [vmem:[#allocation10 + $0x2c] sm:$0xf]
    %v540 = vld [vmem:[#allocation10 + $0x30] sm:$0xf]
    %v541 = vld [vmem:[#allocation10 + $0x34] sm:$0xf]
    %v542 = vld [vmem:[#allocation10 + $0x38] sm:$0xf]
    %v543 = vld [vmem:[#allocation10 + $0x3c] sm:$0xf]
    %v544 = vld [vmem:[%s7] sm:$0x1]
    %v546 = vperm.slane %v544, 0
    %v564 = vunpack.c.l.b16 %v528
    %v565 = vunpack.c.l.b16 %v529
    %v566 = vunpack.c.l.b16 %v530
    %v567 = vunpack.c.l.b16 %v531
    %v568 = vunpack.c.l.b16 %v532
    %v569 = vunpack.c.l.b16 %v533
    %v570 = vunpack.c.l.b16 %v534
    %v571 = vunpack.c.l.b16 %v535
    %v572 = vunpack.c.l.b16 %v536
    %v573 = vunpack.c.l.b16 %v537
    %v574 = vunpack.c.l.b16 %v538
    %v575 = vunpack.c.l.b16 %v539
    %v576 = vunpack.c.l.b16 %v540
    %v577 = vunpack.c.l.b16 %v541
    %v578 = vunpack.c.l.b16 %v542
    %v579 = vunpack.c.l.b16 %v543
    %v580 = vpack.c.b16 %v565, %v564
    %v581 = vpack.c.b16 %v567, %v566
    %v582 = vpack.c.b16 %v569, %v568
    %v583 = vpack.c.b16 %v571, %v570
    %v584 = vpack.c.b16 %v573, %v572
    %v585 = vpack.c.b16 %v575, %v574
    %v586 = vpack.c.b16 %v577, %v576
    %v587 = vpack.c.b16 %v579, %v578
    %596 = vmatpush.bf16.msra.mxu0 %v587
    %597 = vmatpush.bf16.msra.mxu0 %v586
    %598 = vmatpush.bf16.msra.mxu0 %v585
    %599 = vmatpush.bf16.msra.mxu0 %v584
    %600 = vmatpush.bf16.msra.mxu0 %v583
    %601 = vmatpush.bf16.msra.mxu0 %v582
    %602 = vmatpush.bf16.msra.mxu0 %v581
    %603 = vmatpush.bf16.msra.mxu0 %v580
    %604 = vmatmul.bf16.gmra.mxu0 %v194
    %v605 = vpop.f32.mrf.mxu0
    %v606 = vadd.f32 %v546, %v605
    %v607 = vpop.f32.mrf.mxu0
    %608 = vdwg.mxu0
    %v609 = vmul.f32 %v427, %v606
    %v610 = vadd.f32 %v525, %v609
    %v611 = vtanh.pop %v610
    %v612 = vsub.f32 1.0, %v446
    %v613 = vmul.f32 %v612, %v611
    %v614 = vmul.f32 %v446, %v150
    %v615 = vadd.f32 %v613, %v614
    %616 = vst [vmem:[#allocation15] sm:$0xff] %v615
    %v617 = vld [vmem:[#allocation5] sm:$0xf]
    %v618 = vld [vmem:[#allocation5 + $0x4] sm:$0xf]
    %v619 = vld [vmem:[#allocation5 + $0x8] sm:$0xf]
    %v620 = vld [vmem:[#allocation5 + $0xc] sm:$0xf]
    %v621 = vld [vmem:[#allocation5 + $0x10] sm:$0xf]
    %v622 = vld [vmem:[#allocation5 + $0x14] sm:$0xf]
    %v623 = vld [vmem:[#allocation5 + $0x18] sm:$0xf]
    %v624 = vld [vmem:[#allocation5 + $0x1c] sm:$0xf]
    %v625 = vld [vmem:[#allocation5 + $0x20] sm:$0xf]
    %v626 = vld [vmem:[#allocation5 + $0x24] sm:$0xf]
    %v627 = vld [vmem:[#allocation5 + $0x28] sm:$0xf]
    %v628 = vld [vmem:[#allocation5 + $0x2c] sm:$0xf]
    %v629 = vld [vmem:[#allocation5 + $0x30] sm:$0xf]
    %v630 = vld [vmem:[#allocation5 + $0x34] sm:$0xf]
    %v631 = vld [vmem:[#allocation5 + $0x38] sm:$0xf]
    %v632 = vld [vmem:[#allocation5 + $0x3c] sm:$0xf]
    %v633 = vld [vmem:[#allocation5 + $0x40] sm:$0xf]
    %v634 = vld [vmem:[#allocation5 + $0x44] sm:$0xf]
    %v635 = vld [vmem:[#allocation5 + $0x48] sm:$0xf]
    %v636 = vld [vmem:[#allocation5 + $0x4c] sm:$0xf]
    %v637 = vld [vmem:[#allocation5 + $0x50] sm:$0xf]
    %v638 = vld [vmem:[#allocation5 + $0x54] sm:$0xf]
    %v639 = vld [vmem:[#allocation5 + $0x58] sm:$0xf]
    %v640 = vld [vmem:[#allocation5 + $0x5c] sm:$0xf]
    %v641 = vld [vmem:[#allocation5 + $0x60] sm:$0xf]
    %v642 = vld [vmem:[#allocation5 + $0x64] sm:$0xf]
    %v643 = vld [vmem:[#allocation5 + $0x68] sm:$0xf]
    %v644 = vld [vmem:[#allocation5 + $0x6c] sm:$0xf]
    %v645 = vld [vmem:[#allocation5 + $0x70] sm:$0xf]
    %v646 = vld [vmem:[#allocation5 + $0x74] sm:$0xf]
    %v647 = vld [vmem:[#allocation5 + $0x78] sm:$0xf]
    %v648 = vld [vmem:[#allocation5 + $0x7c] sm:$0xf]
    %v649 = vld [vmem:[#allocation5 + $0x80] sm:$0xf]
    %v650 = vld [vmem:[#allocation5 + $0x84] sm:$0xf]
    %v651 = vld [vmem:[#allocation5 + $0x88] sm:$0xf]
    %v652 = vld [vmem:[#allocation5 + $0x8c] sm:$0xf]
    %v653 = vld [vmem:[#allocation5 + $0x90] sm:$0xf]
    %v654 = vld [vmem:[#allocation5 + $0x94] sm:$0xf]
    %v655 = vld [vmem:[#allocation5 + $0x98] sm:$0xf]
    %v656 = vld [vmem:[#allocation5 + $0x9c] sm:$0xf]
    %v657 = vld [vmem:[#allocation5 + $0xa0] sm:$0xf]
    %v658 = vld [vmem:[#allocation5 + $0xa4] sm:$0xf]
    %v659 = vld [vmem:[#allocation5 + $0xa8] sm:$0xf]
    %v660 = vld [vmem:[#allocation5 + $0xac] sm:$0xf]
    %v661 = vld [vmem:[#allocation5 + $0xb0] sm:$0xf]
    %v662 = vld [vmem:[#allocation5 + $0xb4] sm:$0xf]
    %v663 = vld [vmem:[#allocation5 + $0xb8] sm:$0xf]
    %v664 = vld [vmem:[#allocation5 + $0xbc] sm:$0xf]
    %v665 = vld [vmem:[#allocation5 + $0xc0] sm:$0xf]
    %v666 = vld [vmem:[#allocation5 + $0xc4] sm:$0xf]
    %v667 = vld [vmem:[#allocation5 + $0xc8] sm:$0xf]
    %v668 = vld [vmem:[#allocation5 + $0xcc] sm:$0xf]
    %v669 = vld [vmem:[#allocation5 + $0xd0] sm:$0xf]
    %v670 = vld [vmem:[#allocation5 + $0xd4] sm:$0xf]
    %v671 = vld [vmem:[#allocation5 + $0xd8] sm:$0xf]
    %v672 = vld [vmem:[#allocation5 + $0xdc] sm:$0xf]
    %v673 = vld [vmem:[#allocation5 + $0xe0] sm:$0xf]
    %v674 = vld [vmem:[#allocation5 + $0xe4] sm:$0xf]
    %v675 = vld [vmem:[#allocation5 + $0xe8] sm:$0xf]
    %v676 = vld [vmem:[#allocation5 + $0xec] sm:$0xf]
    %v677 = vld [vmem:[#allocation5 + $0xf0] sm:$0xf]
    %v678 = vld [vmem:[#allocation5 + $0xf4] sm:$0xf]
    %v679 = vld [vmem:[#allocation5 + $0xf8] sm:$0xf]
    %v680 = vld [vmem:[#allocation5 + $0xfc] sm:$0xf]
    %v681 = vld [vmem:[#allocation5 + $0x100] sm:$0xf]
    %v682 = vld [vmem:[#allocation5 + $0x104] sm:$0xf]
    %v683 = vld [vmem:[#allocation5 + $0x108] sm:$0xf]
    %v684 = vld [vmem:[#allocation5 + $0x10c] sm:$0xf]
    %v685 = vld [vmem:[#allocation5 + $0x110] sm:$0xf]
    %v686 = vld [vmem:[#allocation5 + $0x114] sm:$0xf]
    %v687 = vld [vmem:[#allocation5 + $0x118] sm:$0xf]
    %v688 = vld [vmem:[#allocation5 + $0x11c] sm:$0xf]
    %v689 = vld [vmem:[#allocation5 + $0x120] sm:$0xf]
    %v690 = vld [vmem:[#allocation5 + $0x124] sm:$0xf]
    %v691 = vld [vmem:[#allocation5 + $0x128] sm:$0xf]
    %v692 = vld [vmem:[#allocation5 + $0x12c] sm:$0xf]
    %v693 = vld [vmem:[#allocation5 + $0x130] sm:$0xf]
    %v694 = vld [vmem:[#allocation5 + $0x134] sm:$0xf]
    %v695 = vld [vmem:[#allocation5 + $0x138] sm:$0xf]
    %v696 = vld [vmem:[#allocation5 + $0x13c] sm:$0xf]
    %v697 = vld [vmem:[#allocation5 + $0x140] sm:$0xf]
    %v698 = vld [vmem:[#allocation5 + $0x144] sm:$0xf]
    %v699 = vld [vmem:[#allocation5 + $0x148] sm:$0xf]
    %v700 = vld [vmem:[#allocation5 + $0x14c] sm:$0xf]
    %v701 = vld [vmem:[#allocation5 + $0x150] sm:$0xf]
    %v702 = vld [vmem:[#allocation5 + $0x154] sm:$0xf]
    %v703 = vld [vmem:[#allocation5 + $0x158] sm:$0xf]
    %v704 = vld [vmem:[#allocation5 + $0x15c] sm:$0xf]
    %v705 = vld [vmem:[#allocation5 + $0x160] sm:$0xf]
    %v706 = vld [vmem:[#allocation5 + $0x164] sm:$0xf]
    %v707 = vld [vmem:[#allocation5 + $0x168] sm:$0xf]
    %v708 = vld [vmem:[#allocation5 + $0x16c] sm:$0xf]
    %v709 = vld [vmem:[#allocation5 + $0x170] sm:$0xf]
    %v710 = vld [vmem:[#allocation5 + $0x174] sm:$0xf]
    %v711 = vld [vmem:[#allocation5 + $0x178] sm:$0xf]
    %v712 = vld [vmem:[#allocation5 + $0x17c] sm:$0xf]
    %v713 = vld [vmem:[#allocation5 + $0x180] sm:$0xf]
    %v714 = vld [vmem:[#allocation5 + $0x184] sm:$0xf]
    %v715 = vld [vmem:[#allocation5 + $0x188] sm:$0xf]
    %v716 = vld [vmem:[#allocation5 + $0x18c] sm:$0xf]
    %v717 = vld [vmem:[#allocation5 + $0x190] sm:$0xf]
    %v718 = vld [vmem:[#allocation5 + $0x194] sm:$0xf]
    %v719 = vld [vmem:[#allocation5 + $0x198] sm:$0xf]
    %v720 = vld [vmem:[#allocation5 + $0x19c] sm:$0xf]
    %v721 = vld [vmem:[#allocation5 + $0x1a0] sm:$0xf]
    %v722 = vld [vmem:[#allocation5 + $0x1a4] sm:$0xf]
    %v723 = vld [vmem:[#allocation5 + $0x1a8] sm:$0xf]
    %v724 = vld [vmem:[#allocation5 + $0x1ac] sm:$0xf]
    %v725 = vld [vmem:[#allocation5 + $0x1b0] sm:$0xf]
    %v726 = vld [vmem:[#allocation5 + $0x1b4] sm:$0xf]
    %v727 = vld [vmem:[#allocation5 + $0x1b8] sm:$0xf]
    %v728 = vld [vmem:[#allocation5 + $0x1bc] sm:$0xf]
    %v729 = vld [vmem:[#allocation5 + $0x1c0] sm:$0xf]
    %v730 = vld [vmem:[#allocation5 + $0x1c4] sm:$0xf]
    %v731 = vld [vmem:[#allocation5 + $0x1c8] sm:$0xf]
    %v732 = vld [vmem:[#allocation5 + $0x1cc] sm:$0xf]
    %v733 = vld [vmem:[#allocation5 + $0x1d0] sm:$0xf]
    %v734 = vld [vmem:[#allocation5 + $0x1d4] sm:$0xf]
    %v735 = vld [vmem:[#allocation5 + $0x1d8] sm:$0xf]
    %v736 = vld [vmem:[#allocation5 + $0x1dc] sm:$0xf]
    %v737 = vld [vmem:[#allocation5 + $0x1e0] sm:$0xf]
    %v738 = vld [vmem:[#allocation5 + $0x1e4] sm:$0xf]
    %v739 = vld [vmem:[#allocation5 + $0x1e8] sm:$0xf]
    %v740 = vld [vmem:[#allocation5 + $0x1ec] sm:$0xf]
    %v741 = vld [vmem:[#allocation5 + $0x1f0] sm:$0xf]
    %v742 = vld [vmem:[#allocation5 + $0x1f4] sm:$0xf]
    %v743 = vld [vmem:[#allocation5 + $0x1f8] sm:$0xf]
    %v744 = vld [vmem:[#allocation5 + $0x1fc] sm:$0xf]
    %v745 = vpack.c.bf16 %v615, %v615
    %v747 = vrot.slane %v745, 3
    %vm748 = vcmask 1040384
    %v751 = vsel %vm748, %v745, %v747
    %vm753 = vcmask 1041409
    %v754 = vsel %vm753, %v745, %v747
    %v756 = vrot.slane %v754, 1
    %vm757 = vcmask 1042434
    %v758 = vsel %vm757, %v745, %v747
    %v760 = vrot.slane %v758, 2
    %vm761 = vcmask 1043459
    %v762 = vsel %vm761, %v745, %v747
    %v764 = vrot.slane %v762, 3
    %v765 = vunpack.i.l.s16 %v751
    %v766 = vunpack.i.h.s16 %v751
    %v767 = vunpack.i.l.s16 %v756
    %v768 = vunpack.i.h.s16 %v756
    %v769 = vunpack.i.l.s16 %v760
    %v770 = vunpack.i.h.s16 %v760
    %v771 = vunpack.i.l.s16 %v764
    %v772 = vunpack.i.h.s16 %v764
    %v773 = vpack.i.b16 %v765, %v765
    %v774 = vperm.slane %v773, 0
    %v792 = vunpack.c.l.b16 %v617
    %v793 = vunpack.c.l.b16 %v618
    %v794 = vunpack.c.l.b16 %v619
    %v795 = vunpack.c.l.b16 %v620
    %v796 = vunpack.c.l.b16 %v621
    %v797 = vunpack.c.l.b16 %v622
    %v798 = vunpack.c.l.b16 %v623
    %v799 = vunpack.c.l.b16 %v624
    %v800 = vunpack.c.l.b16 %v625
    %v801 = vunpack.c.l.b16 %v626
    %v802 = vunpack.c.l.b16 %v627
    %v803 = vunpack.c.l.b16 %v628
    %v804 = vunpack.c.l.b16 %v629
    %v805 = vunpack.c.l.b16 %v630
    %v806 = vunpack.c.l.b16 %v631
    %v807 = vunpack.c.l.b16 %v632
    %v808 = vpack.c.b16 %v793, %v792
    %v809 = vpack.c.b16 %v795, %v794
    %v810 = vpack.c.b16 %v797, %v796
    %v811 = vpack.c.b16 %v799, %v798
    %v812 = vpack.c.b16 %v801, %v800
    %v813 = vpack.c.b16 %v803, %v802
    %v814 = vpack.c.b16 %v805, %v804
    %v815 = vpack.c.b16 %v807, %v806
    %824 = vmatpush.bf16.xpose.msra.mxu0 %v815
    %825 = vmatpush.bf16.xpose.msra.mxu0 %v814
    %826 = vmatpush.bf16.xpose.msra.mxu0 %v813
    %827 = vmatpush.bf16.xpose.msra.mxu0 %v812
    %828 = vmatpush.bf16.xpose.msra.mxu0 %v811
    %829 = vmatpush.bf16.xpose.msra.mxu0 %v810
    %830 = vmatpush.bf16.xpose.msra.mxu0 %v809
    %831 = vmatpush.bf16.xpose.msra.mxu0 %v808
    %832 = vmatmul.bf16.gmra.mxu0 %v774
    %v833 = vpop.f32.mrf.mxu0
    %v834 = vadd.f32 0.0, %v833
    %v835 = vpop.f32.mrf.mxu0
    %836 = vdwg.mxu0
    %v837 = vpack.i.b16 %v766, %v766
    %v838 = vperm.slane %v837, 0
    %v856 = vunpack.c.l.b16 %v633
    %v857 = vunpack.c.l.b16 %v634
    %v858 = vunpack.c.l.b16 %v635
    %v859 = vunpack.c.l.b16 %v636
    %v860 = vunpack.c.l.b16 %v637
    %v861 = vunpack.c.l.b16 %v638
    %v862 = vunpack.c.l.b16 %v639
    %v863 = vunpack.c.l.b16 %v640
    %v864 = vunpack.c.l.b16 %v641
    %v865 = vunpack.c.l.b16 %v642
    %v866 = vunpack.c.l.b16 %v643
    %v867 = vunpack.c.l.b16 %v644
    %v868 = vunpack.c.l.b16 %v645
    %v869 = vunpack.c.l.b16 %v646
    %v870 = vunpack.c.l.b16 %v647
    %v871 = vunpack.c.l.b16 %v648
    %v872 = vpack.c.b16 %v857, %v856
    %v873 = vpack.c.b16 %v859, %v858
    %v874 = vpack.c.b16 %v861, %v860
    %v875 = vpack.c.b16 %v863, %v862
    %v876 = vpack.c.b16 %v865, %v864
    %v877 = vpack.c.b16 %v867, %v866
    %v878 = vpack.c.b16 %v869, %v868
    %v879 = vpack.c.b16 %v871, %v870
    %888 = vmatpush.bf16.xpose.msra.mxu0 %v879
    %889 = vmatpush.bf16.xpose.msra.mxu0 %v878
    %890 = vmatpush.bf16.xpose.msra.mxu0 %v877
    %891 = vmatpush.bf16.xpose.msra.mxu0 %v876
    %892 = vmatpush.bf16.xpose.msra.mxu0 %v875
    %893 = vmatpush.bf16.xpose.msra.mxu0 %v874
    %894 = vmatpush.bf16.xpose.msra.mxu0 %v873
    %895 = vmatpush.bf16.xpose.msra.mxu0 %v872
    %896 = vmatmul.bf16.gmra.mxu0 %v838
    %v897 = vpop.f32.mrf.mxu0
    %v898 = vadd.f32 0.0, %v897
    %v899 = vpop.f32.mrf.mxu0
    %900 = vdwg.mxu0
    %v901 = vpack.i.b16 %v767, %v767
    %v902 = vperm.slane %v901, 0
    %v920 = vunpack.c.l.b16 %v649
    %v921 = vunpack.c.l.b16 %v650
    %v922 = vunpack.c.l.b16 %v651
    %v923 = vunpack.c.l.b16 %v652
    %v924 = vunpack.c.l.b16 %v653
    %v925 = vunpack.c.l.b16 %v654
    %v926 = vunpack.c.l.b16 %v655
    %v927 = vunpack.c.l.b16 %v656
    %v928 = vunpack.c.l.b16 %v657
    %v929 = vunpack.c.l.b16 %v658
    %v930 = vunpack.c.l.b16 %v659
    %v931 = vunpack.c.l.b16 %v660
    %v932 = vunpack.c.l.b16 %v661
    %v933 = vunpack.c.l.b16 %v662
    %v934 = vunpack.c.l.b16 %v663
    %v935 = vunpack.c.l.b16 %v664
    %v936 = vpack.c.b16 %v921, %v920
    %v937 = vpack.c.b16 %v923, %v922
    %v938 = vpack.c.b16 %v925, %v924
    %v939 = vpack.c.b16 %v927, %v926
    %v940 = vpack.c.b16 %v929, %v928
    %v941 = vpack.c.b16 %v931, %v930
    %v942 = vpack.c.b16 %v933, %v932
    %v943 = vpack.c.b16 %v935, %v934
    %952 = vmatpush.bf16.xpose.msra.mxu0 %v943
    %953 = vmatpush.bf16.xpose.msra.mxu0 %v942
    %954 = vmatpush.bf16.xpose.msra.mxu0 %v941
    %955 = vmatpush.bf16.xpose.msra.mxu0 %v940
    %956 = vmatpush.bf16.xpose.msra.mxu0 %v939
    %957 = vmatpush.bf16.xpose.msra.mxu0 %v938
    %958 = vmatpush.bf16.xpose.msra.mxu0 %v937
    %959 = vmatpush.bf16.xpose.msra.mxu0 %v936
    %960 = vmatmul.bf16.gmra.mxu0 %v902
    %v961 = vpop.f32.mrf.mxu0
    %v962 = vadd.f32 0.0, %v961
    %v963 = vpop.f32.mrf.mxu0
    %964 = vdwg.mxu0
    %v965 = vpack.i.b16 %v768, %v768
    %v966 = vperm.slane %v965, 0
    %v984 = vunpack.c.l.b16 %v665
    %v985 = vunpack.c.l.b16 %v666
    %v986 = vunpack.c.l.b16 %v667
    %v987 = vunpack.c.l.b16 %v668
    %v988 = vunpack.c.l.b16 %v669
    %v989 = vunpack.c.l.b16 %v670
    %v990 = vunpack.c.l.b16 %v671
    %v991 = vunpack.c.l.b16 %v672
    %v992 = vunpack.c.l.b16 %v673
    %v993 = vunpack.c.l.b16 %v674
    %v994 = vunpack.c.l.b16 %v675
    %v995 = vunpack.c.l.b16 %v676
    %v996 = vunpack.c.l.b16 %v677
    %v997 = vunpack.c.l.b16 %v678
    %v998 = vunpack.c.l.b16 %v679
    %v999 = vunpack.c.l.b16 %v680
    %v1000 = vpack.c.b16 %v985, %v984
    %v1001 = vpack.c.b16 %v987, %v986
    %v1002 = vpack.c.b16 %v989, %v988
    %v1003 = vpack.c.b16 %v991, %v990
    %v1004 = vpack.c.b16 %v993, %v992
    %v1005 = vpack.c.b16 %v995, %v994
    %v1006 = vpack.c.b16 %v997, %v996
    %v1007 = vpack.c.b16 %v999, %v998
    %1016 = vmatpush.bf16.xpose.msra.mxu0 %v1007
    %1017 = vmatpush.bf16.xpose.msra.mxu0 %v1006
    %1018 = vmatpush.bf16.xpose.msra.mxu0 %v1005
    %1019 = vmatpush.bf16.xpose.msra.mxu0 %v1004
    %1020 = vmatpush.bf16.xpose.msra.mxu0 %v1003
    %1021 = vmatpush.bf16.xpose.msra.mxu0 %v1002
    %1022 = vmatpush.bf16.xpose.msra.mxu0 %v1001
    %1023 = vmatpush.bf16.xpose.msra.mxu0 %v1000
    %1024 = vmatmul.bf16.gmra.mxu0 %v966
    %v1025 = vpop.f32.mrf.mxu0
    %v1026 = vadd.f32 0.0, %v1025
    %v1027 = vpop.f32.mrf.mxu0
    %1028 = vdwg.mxu0
    %v1029 = vpack.i.b16 %v769, %v769
    %v1030 = vperm.slane %v1029, 0
    %v1048 = vunpack.c.l.b16 %v681
    %v1049 = vunpack.c.l.b16 %v682
    %v1050 = vunpack.c.l.b16 %v683
    %v1051 = vunpack.c.l.b16 %v684
    %v1052 = vunpack.c.l.b16 %v685
    %v1053 = vunpack.c.l.b16 %v686
    %v1054 = vunpack.c.l.b16 %v687
    %v1055 = vunpack.c.l.b16 %v688
    %v1056 = vunpack.c.l.b16 %v689
    %v1057 = vunpack.c.l.b16 %v690
    %v1058 = vunpack.c.l.b16 %v691
    %v1059 = vunpack.c.l.b16 %v692
    %v1060 = vunpack.c.l.b16 %v693
    %v1061 = vunpack.c.l.b16 %v694
    %v1062 = vunpack.c.l.b16 %v695
    %v1063 = vunpack.c.l.b16 %v696
    %v1064 = vpack.c.b16 %v1049, %v1048
    %v1065 = vpack.c.b16 %v1051, %v1050
    %v1066 = vpack.c.b16 %v1053, %v1052
    %v1067 = vpack.c.b16 %v1055, %v1054
    %v1068 = vpack.c.b16 %v1057, %v1056
    %v1069 = vpack.c.b16 %v1059, %v1058
    %v1070 = vpack.c.b16 %v1061, %v1060
    %v1071 = vpack.c.b16 %v1063, %v1062
    %1080 = vmatpush.bf16.xpose.msra.mxu0 %v1071
    %1081 = vmatpush.bf16.xpose.msra.mxu0 %v1070
    %1082 = vmatpush.bf16.xpose.msra.mxu0 %v1069
    %1083 = vmatpush.bf16.xpose.msra.mxu0 %v1068
    %1084 = vmatpush.bf16.xpose.msra.mxu0 %v1067
    %1085 = vmatpush.bf16.xpose.msra.mxu0 %v1066
    %1086 = vmatpush.bf16.xpose.msra.mxu0 %v1065
    %1087 = vmatpush.bf16.xpose.msra.mxu0 %v1064
    %1088 = vmatmul.bf16.gmra.mxu0 %v1030
    %v1089 = vpop.f32.mrf.mxu0
    %v1090 = vadd.f32 0.0, %v1089
    %v1091 = vpop.f32.mrf.mxu0
    %1092 = vdwg.mxu0
    %v1093 = vpack.i.b16 %v770, %v770
    %v1094 = vperm.slane %v1093, 0
    %v1112 = vunpack.c.l.b16 %v697
    %v1113 = vunpack.c.l.b16 %v698
    %v1114 = vunpack.c.l.b16 %v699
    %v1115 = vunpack.c.l.b16 %v700
    %v1116 = vunpack.c.l.b16 %v701
    %v1117 = vunpack.c.l.b16 %v702
    %v1118 = vunpack.c.l.b16 %v703
    %v1119 = vunpack.c.l.b16 %v704
    %v1120 = vunpack.c.l.b16 %v705
    %v1121 = vunpack.c.l.b16 %v706
    %v1122 = vunpack.c.l.b16 %v707
    %v1123 = vunpack.c.l.b16 %v708
    %v1124 = vunpack.c.l.b16 %v709
    %v1125 = vunpack.c.l.b16 %v710
    %v1126 = vunpack.c.l.b16 %v711
    %v1127 = vunpack.c.l.b16 %v712
    %v1128 = vpack.c.b16 %v1113, %v1112
    %v1129 = vpack.c.b16 %v1115, %v1114
    %v1130 = vpack.c.b16 %v1117, %v1116
    %v1131 = vpack.c.b16 %v1119, %v1118
    %v1132 = vpack.c.b16 %v1121, %v1120
    %v1133 = vpack.c.b16 %v1123, %v1122
    %v1134 = vpack.c.b16 %v1125, %v1124
    %v1135 = vpack.c.b16 %v1127, %v1126
    %1144 = vmatpush.bf16.xpose.msra.mxu0 %v1135
    %1145 = vmatpush.bf16.xpose.msra.mxu0 %v1134
    %1146 = vmatpush.bf16.xpose.msra.mxu0 %v1133
    %1147 = vmatpush.bf16.xpose.msra.mxu0 %v1132
    %1148 = vmatpush.bf16.xpose.msra.mxu0 %v1131
    %1149 = vmatpush.bf16.xpose.msra.mxu0 %v1130
    %1150 = vmatpush.bf16.xpose.msra.mxu0 %v1129
    %1151 = vmatpush.bf16.xpose.msra.mxu0 %v1128
    %1152 = vmatmul.bf16.gmra.mxu0 %v1094
    %v1153 = vpop.f32.mrf.mxu0
    %v1154 = vadd.f32 0.0, %v1153
    %v1155 = vpop.f32.mrf.mxu0
    %1156 = vdwg.mxu0
    %v1157 = vpack.i.b16 %v771, %v771
    %v1158 = vperm.slane %v1157, 0
    %v1176 = vunpack.c.l.b16 %v713
    %v1177 = vunpack.c.l.b16 %v714
    %v1178 = vunpack.c.l.b16 %v715
    %v1179 = vunpack.c.l.b16 %v716
    %v1180 = vunpack.c.l.b16 %v717
    %v1181 = vunpack.c.l.b16 %v718
    %v1182 = vunpack.c.l.b16 %v719
    %v1183 = vunpack.c.l.b16 %v720
    %v1184 = vunpack.c.l.b16 %v721
    %v1185 = vunpack.c.l.b16 %v722
    %v1186 = vunpack.c.l.b16 %v723
    %v1187 = vunpack.c.l.b16 %v724
    %v1188 = vunpack.c.l.b16 %v725
    %v1189 = vunpack.c.l.b16 %v726
    %v1190 = vunpack.c.l.b16 %v727
    %v1191 = vunpack.c.l.b16 %v728
    %v1192 = vpack.c.b16 %v1177, %v1176
    %v1193 = vpack.c.b16 %v1179, %v1178
    %v1194 = vpack.c.b16 %v1181, %v1180
    %v1195 = vpack.c.b16 %v1183, %v1182
    %v1196 = vpack.c.b16 %v1185, %v1184
    %v1197 = vpack.c.b16 %v1187, %v1186
    %v1198 = vpack.c.b16 %v1189, %v1188
    %v1199 = vpack.c.b16 %v1191, %v1190
    %1208 = vmatpush.bf16.xpose.msra.mxu0 %v1199
    %1209 = vmatpush.bf16.xpose.msra.mxu0 %v1198
    %1210 = vmatpush.bf16.xpose.msra.mxu0 %v1197
    %1211 = vmatpush.bf16.xpose.msra.mxu0 %v1196
    %1212 = vmatpush.bf16.xpose.msra.mxu0 %v1195
    %1213 = vmatpush.bf16.xpose.msra.mxu0 %v1194
    %1214 = vmatpush.bf16.xpose.msra.mxu0 %v1193
    %1215 = vmatpush.bf16.xpose.msra.mxu0 %v1192
    %1216 = vmatmul.bf16.gmra.mxu0 %v1158
    %v1217 = vpop.f32.mrf.mxu0
    %v1218 = vadd.f32 0.0, %v1217
    %v1219 = vpop.f32.mrf.mxu0
    %1220 = vdwg.mxu0
    %v1221 = vpack.i.b16 %v772, %v772
    %v1222 = vperm.slane %v1221, 0
    %v1240 = vunpack.c.l.b16 %v729
    %v1241 = vunpack.c.l.b16 %v730
    %v1242 = vunpack.c.l.b16 %v731
    %v1243 = vunpack.c.l.b16 %v732
    %v1244 = vunpack.c.l.b16 %v733
    %v1245 = vunpack.c.l.b16 %v734
    %v1246 = vunpack.c.l.b16 %v735
    %v1247 = vunpack.c.l.b16 %v736
    %v1248 = vunpack.c.l.b16 %v737
    %v1249 = vunpack.c.l.b16 %v738
    %v1250 = vunpack.c.l.b16 %v739
    %v1251 = vunpack.c.l.b16 %v740
    %v1252 = vunpack.c.l.b16 %v741
    %v1253 = vunpack.c.l.b16 %v742
    %v1254 = vunpack.c.l.b16 %v743
    %v1255 = vunpack.c.l.b16 %v744
    %v1256 = vpack.c.b16 %v1241, %v1240
    %v1257 = vpack.c.b16 %v1243, %v1242
    %v1258 = vpack.c.b16 %v1245, %v1244
    %v1259 = vpack.c.b16 %v1247, %v1246
    %v1260 = vpack.c.b16 %v1249, %v1248
    %v1261 = vpack.c.b16 %v1251, %v1250
    %v1262 = vpack.c.b16 %v1253, %v1252
    %v1263 = vpack.c.b16 %v1255, %v1254
    %1272 = vmatpush.bf16.xpose.msra.mxu0 %v1263
    %1273 = vmatpush.bf16.xpose.msra.mxu0 %v1262
    %1274 = vmatpush.bf16.xpose.msra.mxu0 %v1261
    %1275 = vmatpush.bf16.xpose.msra.mxu0 %v1260
    %1276 = vmatpush.bf16.xpose.msra.mxu0 %v1259
    %1277 = vmatpush.bf16.xpose.msra.mxu0 %v1258
    %1278 = vmatpush.bf16.xpose.msra.mxu0 %v1257
    %1279 = vmatpush.bf16.xpose.msra.mxu0 %v1256
    %1280 = vmatmul.bf16.gmra.mxu0 %v1222
    %v1281 = vpop.f32.mrf.mxu0
    %v1282 = vadd.f32 0.0, %v1281
    %v1283 = vpop.f32.mrf.mxu0
    %1284 = vdwg.mxu0
    %v1285 = vlaneseq
    %v1286 = vand.u32 %v1285, 127
    %vm1287 = vcmp.lt.s32.totalorder %v1286, 10
    %v1288 = vsel %vm1287, %v834, -1e+30
    %v1289 = vsel %vm1287, %v898, -1e+30
    %v1290 = vsel %vm1287, %v962, -1e+30
    %v1291 = vsel %vm1287, %v1026, -1e+30
    %v1292 = vsel %vm1287, %v1090, -1e+30
    %v1293 = vsel %vm1287, %v1154, -1e+30
    %v1294 = vsel %vm1287, %v1218, -1e+30
    %v1295 = vsel %vm1287, %v1282, -1e+30
    %v1296 = vsel %vm748, %v1288, -inf
    %1297 = vmax.xlane.f32.xlu0 %v1296
    %v1298 = vpop.xlane.xlu0 %1297
    %v1299 = vsel %vm748, %v1289, -inf
    %1300 = vmax.xlane.f32.xlu0 %v1299
    %v1301 = vpop.xlane.xlu0 %1300
    %v1302 = vsel %vm748, %v1290, -inf
    %1303 = vmax.xlane.f32.xlu0 %v1302
    %v1304 = vpop.xlane.xlu0 %1303
    %v1305 = vsel %vm748, %v1291, -inf
    %1306 = vmax.xlane.f32.xlu0 %v1305
    %v1307 = vpop.xlane.xlu0 %1306
    %v1308 = vsel %vm748, %v1292, -inf
    %1309 = vmax.xlane.f32.xlu0 %v1308
    %v1310 = vpop.xlane.xlu0 %1309
    %v1311 = vsel %vm748, %v1293, -inf
    %1312 = vmax.xlane.f32.xlu0 %v1311
    %v1313 = vpop.xlane.xlu0 %1312
    %v1314 = vsel %vm748, %v1294, -inf
    %1315 = vmax.xlane.f32.xlu0 %v1314
    %v1316 = vpop.xlane.xlu0 %1315
    %v1317 = vsel %vm748, %v1295, -inf
    %1318 = vmax.xlane.f32.xlu0 %v1317
    %v1319 = vpop.xlane.xlu0 %1318
    %v1320 = vsub.f32 %v1288, %v1298
    %v1321 = vsub.f32 %v1289, %v1301
    %v1322 = vsub.f32 %v1290, %v1304
    %v1323 = vsub.f32 %v1291, %v1307
    %v1324 = vsub.f32 %v1292, %v1310
    %v1325 = vsub.f32 %v1293, %v1313
    %v1326 = vsub.f32 %v1294, %v1316
    %v1327 = vsub.f32 %v1295, %v1319
    %v1328 = vmul.f32 %v1320, 1.442695
    %v1329 = vpow.pop %v1328
    %v1330 = vmul.f32 %v1321, 1.442695
    %v1331 = vpow.pop %v1330
    %v1332 = vmul.f32 %v1322, 1.442695
    %v1333 = vpow.pop %v1332
    %v1334 = vmul.f32 %v1323, 1.442695
    %v1335 = vpow.pop %v1334
    %v1336 = vmul.f32 %v1324, 1.442695
    %v1337 = vpow.pop %v1336
    %v1338 = vmul.f32 %v1325, 1.442695
    %v1339 = vpow.pop %v1338
    %v1340 = vmul.f32 %v1326, 1.442695
    %v1341 = vpow.pop %v1340
    %v1342 = vmul.f32 %v1327, 1.442695
    %v1343 = vpow.pop %v1342
    %v1344 = vsel %vm748, %v1329, 0.0
    %1345 = vadd.xlane.f32.xlu0 %v1344
    %v1346 = vpop.xlane.xlu0 %1345
    %v1347 = vsel %vm748, %v1331, 0.0
    %1348 = vadd.xlane.f32.xlu0 %v1347
    %v1349 = vpop.xlane.xlu0 %1348
    %v1350 = vsel %vm748, %v1333, 0.0
    %1351 = vadd.xlane.f32.xlu0 %v1350
    %v1352 = vpop.xlane.xlu0 %1351
    %v1353 = vsel %vm748, %v1335, 0.0
    %1354 = vadd.xlane.f32.xlu0 %v1353
    %v1355 = vpop.xlane.xlu0 %1354
    %v1356 = vsel %vm748, %v1337, 0.0
    %1357 = vadd.xlane.f32.xlu0 %v1356
    %v1358 = vpop.xlane.xlu0 %1357
    %v1359 = vsel %vm748, %v1339, 0.0
    %1360 = vadd.xlane.f32.xlu0 %v1359
    %v1361 = vpop.xlane.xlu0 %1360
    %v1362 = vsel %vm748, %v1341, 0.0
    %1363 = vadd.xlane.f32.xlu0 %v1362
    %v1364 = vpop.xlane.xlu0 %1363
    %v1365 = vsel %vm748, %v1343, 0.0
    %1366 = vadd.xlane.f32.xlu0 %v1365
    %v1367 = vpop.xlane.xlu0 %1366
    %v1368 = vrcp.pop %v1346
    %v1369 = vrcp.pop %v1349
    %v1370 = vrcp.pop %v1352
    %v1371 = vrcp.pop %v1355
    %v1372 = vrcp.pop %v1358
    %v1373 = vrcp.pop %v1361
    %v1374 = vrcp.pop %v1364
    %v1375 = vrcp.pop %v1367
    %v1376 = vmul.f32 %v1346, %v1368
    %v1377 = vmul.f32 %v1349, %v1369
    %v1378 = vmul.f32 %v1352, %v1370
    %v1379 = vmul.f32 %v1355, %v1371
    %v1380 = vmul.f32 %v1358, %v1372
    %v1381 = vmul.f32 %v1361, %v1373
    %v1382 = vmul.f32 %v1364, %v1374
    %v1383 = vmul.f32 %v1367, %v1375
    %v1384 = vsub.f32 2.0, %v1376
    %v1385 = vsub.f32 2.0, %v1377
    %v1386 = vsub.f32 2.0, %v1378
    %v1387 = vsub.f32 2.0, %v1379
    %v1388 = vsub.f32 2.0, %v1380
    %v1389 = vsub.f32 2.0, %v1381
    %v1390 = vsub.f32 2.0, %v1382
    %v1391 = vsub.f32 2.0, %v1383
    %v1392 = vmul.f32 %v1368, %v1384
    %v1393 = vmul.f32 %v1369, %v1385
    %v1394 = vmul.f32 %v1370, %v1386
    %v1395 = vmul.f32 %v1371, %v1387
    %v1396 = vmul.f32 %v1372, %v1388
    %v1397 = vmul.f32 %v1373, %v1389
    %v1398 = vmul.f32 %v1374, %v1390
    %v1399 = vmul.f32 %v1375, %v1391
    %v1400 = vmul.f32 %v1329, %v1392
    %v1401 = vmul.f32 %v1331, %v1393
    %v1402 = vmul.f32 %v1333, %v1394
    %v1403 = vmul.f32 %v1335, %v1395
    %v1404 = vmul.f32 %v1337, %v1396
    %v1405 = vmul.f32 %v1339, %v1397
    %v1406 = vmul.f32 %v1341, %v1398
    %v1407 = vmul.f32 %v1343, %v1399
    %v1408 = vpack.c.bf16 %v1400, %v1400
    %v1409 = vpack.c.bf16 %v1401, %v1401
    %v1410 = vpack.c.bf16 %v1402, %v1402
    %v1411 = vpack.c.bf16 %v1403, %v1403
    %v1412 = vpack.c.bf16 %v1404, %v1404
    %v1413 = vpack.c.bf16 %v1405, %v1405
    %v1414 = vpack.c.bf16 %v1406, %v1406
    %v1415 = vpack.c.bf16 %v1407, %v1407
    %1416 = vmatpush.bf16.msra.mxu0 %v815
    %1417 = vmatpush.bf16.msra.mxu0 %v814
    %1418 = vmatpush.bf16.msra.mxu0 %v813
    %1419 = vmatpush.bf16.msra.mxu0 %v812
    %1420 = vmatpush.bf16.msra.mxu0 %v811
    %1421 = vmatpush.bf16.msra.mxu0 %v810
    %1422 = vmatpush.bf16.msra.mxu0 %v809
    %1423 = vmatpush.bf16.msra.mxu0 %v808
    %1424 = vmatmul.bf16.gmra.mxu0 %v1408
    %v1425 = vpop.f32.mrf.mxu0
    %v1426 = vadd.f32 0.0, %v1425
    %v1427 = vpop.f32.mrf.mxu0
    %1428 = vdwg.mxu0
    %1429 = vmatpush.bf16.msra.mxu0 %v879
    %1430 = vmatpush.bf16.msra.mxu0 %v878
    %1431 = vmatpush.bf16.msra.mxu0 %v877
    %1432 = vmatpush.bf16.msra.mxu0 %v876
    %1433 = vmatpush.bf16.msra.mxu0 %v875
    %1434 = vmatpush.bf16.msra.mxu0 %v874
    %1435 = vmatpush.bf16.msra.mxu0 %v873
    %1436 = vmatpush.bf16.msra.mxu0 %v872
    %1437 = vmatmul.bf16.gmra.mxu0 %v1409
    %v1438 = vpop.f32.mrf.mxu0
    %v1439 = vadd.f32 0.0, %v1438
    %v1440 = vpop.f32.mrf.mxu0
    %1441 = vdwg.mxu0
    %1442 = vmatpush.bf16.msra.mxu0 %v943
    %1443 = vmatpush.bf16.msra.mxu0 %v942
    %1444 = vmatpush.bf16.msra.mxu0 %v941
    %1445 = vmatpush.bf16.msra.mxu0 %v940
    %1446 = vmatpush.bf16.msra.mxu0 %v939
    %1447 = vmatpush.bf16.msra.mxu0 %v938
    %1448 = vmatpush.bf16.msra.mxu0 %v937
    %1449 = vmatpush.bf16.msra.mxu0 %v936
    %1450 = vmatmul.bf16.gmra.mxu0 %v1410
    %v1451 = vpop.f32.mrf.mxu0
    %v1452 = vadd.f32 0.0, %v1451
    %v1453 = vpop.f32.mrf.mxu0
    %1454 = vdwg.mxu0
    %1455 = vmatpush.bf16.msra.mxu0 %v1007
    %1456 = vmatpush.bf16.msra.mxu0 %v1006
    %1457 = vmatpush.bf16.msra.mxu0 %v1005
    %1458 = vmatpush.bf16.msra.mxu0 %v1004
    %1459 = vmatpush.bf16.msra.mxu0 %v1003
    %1460 = vmatpush.bf16.msra.mxu0 %v1002
    %1461 = vmatpush.bf16.msra.mxu0 %v1001
    %1462 = vmatpush.bf16.msra.mxu0 %v1000
    %1463 = vmatmul.bf16.gmra.mxu0 %v1411
    %v1464 = vpop.f32.mrf.mxu0
    %v1465 = vadd.f32 0.0, %v1464
    %v1466 = vpop.f32.mrf.mxu0
    %1467 = vdwg.mxu0
    %1468 = vmatpush.bf16.msra.mxu0 %v1071
    %1469 = vmatpush.bf16.msra.mxu0 %v1070
    %1470 = vmatpush.bf16.msra.mxu0 %v1069
    %1471 = vmatpush.bf16.msra.mxu0 %v1068
    %1472 = vmatpush.bf16.msra.mxu0 %v1067
    %1473 = vmatpush.bf16.msra.mxu0 %v1066
    %1474 = vmatpush.bf16.msra.mxu0 %v1065
    %1475 = vmatpush.bf16.msra.mxu0 %v1064
    %1476 = vmatmul.bf16.gmra.mxu0 %v1412
    %v1477 = vpop.f32.mrf.mxu0
    %v1478 = vadd.f32 0.0, %v1477
    %v1479 = vpop.f32.mrf.mxu0
    %1480 = vdwg.mxu0
    %1481 = vmatpush.bf16.msra.mxu0 %v1135
    %1482 = vmatpush.bf16.msra.mxu0 %v1134
    %1483 = vmatpush.bf16.msra.mxu0 %v1133
    %1484 = vmatpush.bf16.msra.mxu0 %v1132
    %1485 = vmatpush.bf16.msra.mxu0 %v1131
    %1486 = vmatpush.bf16.msra.mxu0 %v1130
    %1487 = vmatpush.bf16.msra.mxu0 %v1129
    %1488 = vmatpush.bf16.msra.mxu0 %v1128
    %1489 = vmatmul.bf16.gmra.mxu0 %v1413
    %v1490 = vpop.f32.mrf.mxu0
    %v1491 = vadd.f32 0.0, %v1490
    %v1492 = vpop.f32.mrf.mxu0
    %1493 = vdwg.mxu0
    %1494 = vmatpush.bf16.msra.mxu0 %v1199
    %1495 = vmatpush.bf16.msra.mxu0 %v1198
    %1496 = vmatpush.bf16.msra.mxu0 %v1197
    %1497 = vmatpush.bf16.msra.mxu0 %v1196
    %1498 = vmatpush.bf16.msra.mxu0 %v1195
    %1499 = vmatpush.bf16.msra.mxu0 %v1194
    %1500 = vmatpush.bf16.msra.mxu0 %v1193
    %1501 = vmatpush.bf16.msra.mxu0 %v1192
    %1502 = vmatmul.bf16.gmra.mxu0 %v1414
    %v1503 = vpop.f32.mrf.mxu0
    %v1504 = vadd.f32 0.0, %v1503
    %v1505 = vpop.f32.mrf.mxu0
    %1506 = vdwg.mxu0
    %1507 = vmatpush.bf16.msra.mxu0 %v1263
    %1508 = vmatpush.bf16.msra.mxu0 %v1262
    %1509 = vmatpush.bf16.msra.mxu0 %v1261
    %1510 = vmatpush.bf16.msra.mxu0 %v1260
    %1511 = vmatpush.bf16.msra.mxu0 %v1259
    %1512 = vmatpush.bf16.msra.mxu0 %v1258
    %1513 = vmatpush.bf16.msra.mxu0 %v1257
    %1514 = vmatpush.bf16.msra.mxu0 %v1256
    %1515 = vmatmul.bf16.gmra.mxu0 %v1415
    %v1516 = vpop.f32.mrf.mxu0
    %v1517 = vadd.f32 0.0, %v1516
    %v1518 = vpop.f32.mrf.mxu0
    %1519 = vdwg.mxu0
    %v1520 = vld [vmem:[#allocation11] sm:$0xf]
    %v1521 = vld [vmem:[#allocation11 + $0x4] sm:$0xf]
    %v1522 = vld [vmem:[#allocation11 + $0x8] sm:$0xf]
    %v1523 = vld [vmem:[#allocation11 + $0xc] sm:$0xf]
    %v1524 = vld [vmem:[#allocation11 + $0x10] sm:$0xf]
    %v1525 = vld [vmem:[#allocation11 + $0x14] sm:$0xf]
    %v1526 = vld [vmem:[#allocation11 + $0x18] sm:$0xf]
    %v1527 = vld [vmem:[#allocation11 + $0x1c] sm:$0xf]
    %v1528 = vld [vmem:[#allocation11 + $0x20] sm:$0xf]
    %v1529 = vld [vmem:[#allocation11 + $0x24] sm:$0xf]
    %v1530 = vld [vmem:[#allocation11 + $0x28] sm:$0xf]
    %v1531 = vld [vmem:[#allocation11 + $0x2c] sm:$0xf]
    %v1532 = vld [vmem:[#allocation11 + $0x30] sm:$0xf]
    %v1533 = vld [vmem:[#allocation11 + $0x34] sm:$0xf]
    %v1534 = vld [vmem:[#allocation11 + $0x38] sm:$0xf]
    %v1535 = vld [vmem:[#allocation11 + $0x3c] sm:$0xf]
    %v1536 = vpack.c.bf16 %v1426, %v1426
    %v1537 = vpack.c.bf16 %v1439, %v1439
    %v1538 = vpack.c.bf16 %v1452, %v1452
    %v1539 = vpack.c.bf16 %v1465, %v1465
    %v1540 = vpack.c.bf16 %v1478, %v1478
    %v1541 = vpack.c.bf16 %v1491, %v1491
    %v1542 = vpack.c.bf16 %v1504, %v1504
    %v1543 = vpack.c.bf16 %v1517, %v1517
    %v1544 = vld [vmem:[#allocation13] sm:$0xf]
    %v1545 = vld [vmem:[#allocation13 + $0x4] sm:$0xf]
    %v1546 = vld [vmem:[#allocation13 + $0x8] sm:$0xf]
    %v1547 = vld [vmem:[#allocation13 + $0xc] sm:$0xf]
    %v1548 = vld [vmem:[#allocation13 + $0x10] sm:$0xf]
    %v1549 = vld [vmem:[#allocation13 + $0x14] sm:$0xf]
    %v1550 = vld [vmem:[#allocation13 + $0x18] sm:$0xf]
    %v1551 = vld [vmem:[#allocation13 + $0x1c] sm:$0xf]
    %v1552 = vld [vmem:[#allocation13 + $0x20] sm:$0xf]
    %v1553 = vld [vmem:[#allocation13 + $0x24] sm:$0xf]
    %v1554 = vld [vmem:[#allocation13 + $0x28] sm:$0xf]
    %v1555 = vld [vmem:[#allocation13 + $0x2c] sm:$0xf]
    %v1556 = vld [vmem:[#allocation13 + $0x30] sm:$0xf]
    %v1557 = vld [vmem:[#allocation13 + $0x34] sm:$0xf]
    %v1558 = vld [vmem:[#allocation13 + $0x38] sm:$0xf]
    %v1559 = vld [vmem:[#allocation13 + $0x3c] sm:$0xf]
    %v1568 = vunpack.c.l.b16 %v1536
    %v1569 = vunpack.c.l.b16 %v1537
    %v1570 = vunpack.c.l.b16 %v1538
    %v1571 = vunpack.c.l.b16 %v1539
    %v1572 = vunpack.c.l.b16 %v1540
    %v1573 = vunpack.c.l.b16 %v1541
    %v1574 = vunpack.c.l.b16 %v1542
    %v1575 = vunpack.c.l.b16 %v1543
    %v1576 = vrot.slane %v1569, 7
    %v1577 = vsel %vm753, %v1576, %v1568
    %v1578 = vrot.slane %v1570, 6
    %v1579 = vsel %vm757, %v1578, %v1577
    %v1580 = vrot.slane %v1571, 5
    %v1581 = vsel %vm761, %v1580, %v1579
    %v1582 = vrot.slane %v1572, 4
    %vm1583 = vcmask 1044484
    %v1584 = vsel %vm1583, %v1582, %v1581
    %v1585 = vrot.slane %v1573, 3
    %vm1586 = vcmask 1045509
    %v1587 = vsel %vm1586, %v1585, %v1584
    %v1588 = vrot.slane %v1574, 2
    %vm1589 = vcmask 1046534
    %v1590 = vsel %vm1589, %v1588, %v1587
    %v1591 = vrot.slane %v1575, 1
    %vm1592 = vcmask 1047559
    %v1593 = vsel %vm1592, %v1591, %v1590
    %v1594 = vpack.c.b16 %v1593, %v1593
    %v1612 = vunpack.c.l.b16 %v1544
    %v1613 = vunpack.c.l.b16 %v1545
    %v1614 = vunpack.c.l.b16 %v1546
    %v1615 = vunpack.c.l.b16 %v1547
    %v1616 = vunpack.c.l.b16 %v1548
    %v1617 = vunpack.c.l.b16 %v1549
    %v1618 = vunpack.c.l.b16 %v1550
    %v1619 = vunpack.c.l.b16 %v1551
    %v1620 = vunpack.c.l.b16 %v1552
    %v1621 = vunpack.c.l.b16 %v1553
    %v1622 = vunpack.c.l.b16 %v1554
    %v1623 = vunpack.c.l.b16 %v1555
    %v1624 = vunpack.c.l.b16 %v1556
    %v1625 = vunpack.c.l.b16 %v1557
    %v1626 = vunpack.c.l.b16 %v1558
    %v1627 = vunpack.c.l.b16 %v1559
    %v1628 = vpack.c.b16 %v1613, %v1612
    %v1629 = vpack.c.b16 %v1615, %v1614
    %v1630 = vpack.c.b16 %v1617, %v1616
    %v1631 = vpack.c.b16 %v1619, %v1618
    %v1632 = vpack.c.b16 %v1621, %v1620
    %v1633 = vpack.c.b16 %v1623, %v1622
    %v1634 = vpack.c.b16 %v1625, %v1624
    %v1635 = vpack.c.b16 %v1627, %v1626
    %1644 = vmatpush.bf16.msra.mxu0 %v1635
    %1645 = vmatpush.bf16.msra.mxu0 %v1634
    %1646 = vmatpush.bf16.msra.mxu0 %v1633
    %1647 = vmatpush.bf16.msra.mxu0 %v1632
    %1648 = vmatpush.bf16.msra.mxu0 %v1631
    %1649 = vmatpush.bf16.msra.mxu0 %v1630
    %1650 = vmatpush.bf16.msra.mxu0 %v1629
    %1651 = vmatpush.bf16.msra.mxu0 %v1628
    %1652 = vmatmul.bf16.gmra.mxu0 %v1594
    %v1653 = vpop.f32.mrf.mxu0
    %v1654 = vadd.f32 0.0, %v1653
    %v1655 = vpop.f32.mrf.mxu0
    %1656 = vdwg.mxu0
    %v1673 = vunpack.c.l.b16 %v1520
    %v1674 = vunpack.c.l.b16 %v1521
    %v1675 = vunpack.c.l.b16 %v1522
    %v1676 = vunpack.c.l.b16 %v1523
    %v1677 = vunpack.c.l.b16 %v1524
    %v1678 = vunpack.c.l.b16 %v1525
    %v1679 = vunpack.c.l.b16 %v1526
    %v1680 = vunpack.c.l.b16 %v1527
    %v1681 = vunpack.c.l.b16 %v1528
    %v1682 = vunpack.c.l.b16 %v1529
    %v1683 = vunpack.c.l.b16 %v1530
    %v1684 = vunpack.c.l.b16 %v1531
    %v1685 = vunpack.c.l.b16 %v1532
    %v1686 = vunpack.c.l.b16 %v1533
    %v1687 = vunpack.c.l.b16 %v1534
    %v1688 = vunpack.c.l.b16 %v1535
    %v1689 = vpack.c.b16 %v1674, %v1673
    %v1690 = vpack.c.b16 %v1676, %v1675
    %v1691 = vpack.c.b16 %v1678, %v1677
    %v1692 = vpack.c.b16 %v1680, %v1679
    %v1693 = vpack.c.b16 %v1682, %v1681
    %v1694 = vpack.c.b16 %v1684, %v1683
    %v1695 = vpack.c.b16 %v1686, %v1685
    %v1696 = vpack.c.b16 %v1688, %v1687
    %1705 = vmatpush.bf16.msra.mxu0 %v1696
    %1706 = vmatpush.bf16.msra.mxu0 %v1695
    %1707 = vmatpush.bf16.msra.mxu0 %v1694
    %1708 = vmatpush.bf16.msra.mxu0 %v1693
    %1709 = vmatpush.bf16.msra.mxu0 %v1692
    %1710 = vmatpush.bf16.msra.mxu0 %v1691
    %1711 = vmatpush.bf16.msra.mxu0 %v1690
    %1712 = vmatpush.bf16.msra.mxu0 %v1689
    %1713 = vmatmul.bf16.gmra.mxu0 %v745
    %v1714 = vpop.f32.mrf.mxu0
    %v1715 = vadd.f32 %v1654, %v1714
    %v1716 = vpop.f32.mrf.mxu0
    %1717 = vdwg.mxu0
    %v1718 = vld [vmem:[%s10] sm:$0x1]
    %v1720 = vperm.slane %v1718, 0
    %v1722 = vadd.f32 %v1715, %v1720
    %v1723 = vtanh.pop %v1722
    %v1724 = vpack.c.bf16 %v1723, %v1723
    %1725 = vst [vmem:[#allocation14] sm:$0xf] %v1724
    // Predicated region
    $region74: #{tpu_custom_call.1} parent=1 // pred_check
      _
    $region75: #{tpu_custom_call.1} parent=1 // pred_check_branch
      %1727 = sbr.rel (0) target = $region77
    $region76: #{tpu_custom_call.1} parent=1 // pred_region
      %1729 = vsyncadd [#allocation4], 0
      %s1731 = sshll.u32 [#allocation14], 4
      %s1732 = int_to_ptr.vmem [resolvable:$true] %s1731
      %s1733 = sshll.u32 %s11, 4
      %s1734 = int_to_ptr.hbm [resolvable:$true] %s1733
      %1736 = dma.vmem_to_hbm [thread:$0]  %s1732, 64, %s1734, [#allocation4]
    $region77: #{tpu_custom_call.1} parent=1 // pred_fallthru
      _
    // Predicated region
    $region78: #{tpu_custom_call.1} parent=1 // pred_check
      _
    $region79: #{tpu_custom_call.1} parent=1 // pred_check_branch
      %1738 = sbr.rel (0) target = $region81
    $region80: #{tpu_custom_call.1} parent=1 // pred_region
      %1740 = vsyncadd [#allocation16], 0
      %s1742 = sshll.u32 [#allocation15], 4
      %s1743 = int_to_ptr.vmem [resolvable:$true] %s1742
      %s1744 = sshll.u32 %s12, 4
      %s1745 = int_to_ptr.hbm [resolvable:$true] %s1744
      %1747 = dma.vmem_to_hbm [thread:$0]  %s1743, 128, %s1745, [#allocation16]
    $region81: #{tpu_custom_call.1} parent=1 // pred_fallthru
      _
    // Predicated region
    $region82: #{tpu_custom_call.1} parent=1 // pred_check
      _
    $region83: #{tpu_custom_call.1} parent=1 // pred_check_branch
      %1749 = sbr.rel (0) target = $region85
    $region84: #{tpu_custom_call.1} parent=1 // pred_region
      %1751 = dma.done [#allocation4], 64
    $region85: #{tpu_custom_call.1} parent=1 // pred_fallthru
      _
    // Predicated region
    $region86: #{tpu_custom_call.1} parent=1 // pred_check
      _
    $region87: #{tpu_custom_call.1} parent=1 // pred_check_branch
      %1753 = sbr.rel (0) target = $region89
    $region88: #{tpu_custom_call.1} parent=1 // pred_region
      %1755 = dma.done [#allocation16], 128
    $region89: #{tpu_custom_call.1} parent=1 // pred_fallthru
      _
    %1756 = vsyncpa [#allocation3], 1
    %1757 = vsyncpa [#allocation6], 1
    %1758 = vsyncpa [#allocation9], 1
    %1759 = vsyncpa [#allocation12], 1
    %1760 = vsyncpa [#allocation4], 1
    %1761 = vsyncpa [#allocation16], 1

</llo_original>
